<compile_context>
chip_gen: v6e
topology: v6e:2x2x1
jax: 0.10.0
libtpu: 0.0.40
codegen_flags: <defaults>
</compile_context>

<pallas_src>
import jax
import jax.numpy as jnp
from jax import lax
from jax.experimental import pallas as pl
from jax.experimental.pallas import tpu as pltpu


def char_decoder_kernel(ids_ref, wemb_ref, w_h2h_ref, b_h2h_ref,
                        w_eff_ref, b_i_ref, b_hn_ref, w_h_ref,
                        w_out_ref, b_out_ref,
                        logits_ref, h_out_ref,
                        h_all_scr):
    TB = ids_ref.shape[0]
    B = wemb_ref.shape[0]
    G = w_h_ref.shape[0]            # per-gate lane width (multiple of 128)
    C = w_eff_ref.shape[0]
    T = TB // B

    def sigmoid1(x):                # single-EUP sigmoid via tanh
        return 0.5 * (jnp.tanh(0.5 * x) + 1.0)

    # use_head=True path: hidden = ReLU(embedding_to_hidden(word_emb)).
    # Padding lanes of h stay exactly 0 (zero-padded weights/bias, relu(0)=0).
    h = jnp.maximum(
        jnp.dot(wemb_ref[...], w_h2h_ref[...],
                preferred_element_type=jnp.float32) + b_h2h_ref[...], 0.0)   # [B, G]

    # rnn_input_module + input-side GRU gates for ALL steps as ONE one-hot GEMM
    # (emb @ W_ih was folded into w_eff in the wrapper; bit-exact because the
    # one-hot selection commutes with the matmul).
    ids = ids_ref[...]                                                       # [TB, 1]
    onehot = (ids == lax.broadcasted_iota(jnp.int32, (TB, C), 1)
              ).astype(jnp.float32)                                          # [TB, C]
    gi_all = jnp.dot(onehot, w_eff_ref[...],
                     preferred_element_type=jnp.float32) + b_i_ref[...]      # [TB, 3G]

    # Loop-invariant loads / broadcasts hoisted out of the serial recurrence.
    w_h = w_h_ref[...]                                                       # [G, 3G]
    b_hn = jnp.broadcast_to(b_hn_ref[...], (B, G))                           # [B, G]

    # Serial GRU recurrence, fully unrolled (T is small & static).  Only the
    # h-side GEMM + gate nonlinearities are on the per-step critical path.
    for t in range(T):
        gi = gi_all[t * B:(t + 1) * B, :]                                    # static, sublane-aligned
        gh = jnp.dot(h, w_h, preferred_element_type=jnp.float32)             # [B, 3G]
        # PyTorch gate order (r, z, n); b_hr/b_hz already folded into gi,
        # b_hn must stay inside the r * (...) term.
        r = sigmoid1(gi[:, 0:G] + gh[:, 0:G])
        z = sigmoid1(gi[:, G:2 * G] + gh[:, G:2 * G])
        n = jnp.tanh(gi[:, 2 * G:3 * G] + r * (gh[:, 2 * G:3 * G] + b_hn))
        h = (1.0 - z) * n + z * h                                            # [B, G]
        h_all_scr[pl.ds(t * B, B), :] = h

    h_out_ref[...] = h

    # rnn_output_module: one lane-dense GEMM over all steps + a single store.
    logits_ref[...] = jnp.dot(h_all_scr[...], w_out_ref[...],
                              preferred_element_type=jnp.float32) + b_out_ref[...]


def _pad_last(a, width):
    return jnp.pad(a, [(0, 0)] * (a.ndim - 1) + [(0, width - a.shape[-1])])


def char_decoder_forward(params, word_emb, ids):
    T, B, _ = ids.shape
    IE, H = params["w_h2h"].shape
    C, E = params["emb"].shape
    TB = T * B
    G = ((H + 127) // 128) * 128        # per-gate lane width (vreg-aligned gates)
    C_pad = ((C + 127) // 128) * 128    # lane-dense output head

    # --- parameter-only packing (constant-foldable; done once outside the kernel) ---
    # Fused input-side weights: W_eff[g] = emb @ W_ih[g], each gate padded to G lanes.
    w_eff = jnp.concatenate(
        [_pad_last(params["emb"] @ params["w_i"][g], G) for g in range(3)], axis=1)      # [C, 3G]
    # Input-side biases with b_hr / b_hz folded in (b_hn must stay per-step).
    b_i_eff = jnp.concatenate(
        [_pad_last(params["b_i"][0] + params["b_h"][0], G),
         _pad_last(params["b_i"][1] + params["b_h"][1], G),
         _pad_last(params["b_i"][2], G)], axis=1)                                        # [1, 3G]
    b_hn_p = _pad_last(params["b_h"][2], G)                                              # [1, G]
    # Hidden-side weights: rows AND per-gate columns padded to G (zero padding,
    # so the zero padding lanes of h contribute nothing and stay zero).
    w_h_p = jnp.concatenate(
        [jnp.pad(params["w_h"][g], ((0, G - H), (0, G - H))) for g in range(3)], axis=1)  # [G, 3G]
    w_h2h_p = _pad_last(params["w_h2h"], G)                                              # [IE, G]
    b_h2h_p = _pad_last(params["b_h2h"], G)                                              # [1, G]
    w_out_p = jnp.pad(params["w_out"], ((0, G - H), (0, C_pad - C)))                     # [G, C_pad]
    b_out_p = _pad_last(params["b_out"], C_pad)                                          # [1, C_pad]

    ids_flat = ids.reshape(TB, 1).astype(jnp.int32)

    grid_spec = pltpu.PrefetchScalarGridSpec(
        num_scalar_prefetch=0,
        grid=(1,),                                          # single invocation
        in_specs=[
            pl.BlockSpec((TB, 1),      lambda i: (0, 0)),   # char ids (flattened)
            pl.BlockSpec((B, IE),      lambda i: (0, 0)),   # word embeddings
            pl.BlockSpec((IE, G),      lambda i: (0, 0)),   # embedding_to_hidden W^T (padded)
            pl.BlockSpec((1, G),       lambda i: (0, 0)),   # embedding_to_hidden b  (padded)
            pl.BlockSpec((C, 3 * G),   lambda i: (0, 0)),   # fused emb @ W_ih (gate-padded)
            pl.BlockSpec((1, 3 * G),   lambda i: (0, 0)),   # fused b_ih (+ b_hr, b_hz)
            pl.BlockSpec((1, G),       lambda i: (0, 0)),   # b_hn (stays per-step)
            pl.BlockSpec((G, 3 * G),   lambda i: (0, 0)),   # fused GRU W_hh^T (gate-padded)
            pl.BlockSpec((G, C_pad),   lambda i: (0, 0)),   # output W^T (lane-padded)
            pl.BlockSpec((1, C_pad),   lambda i: (0, 0)),   # output b   (lane-padded)
        ],
        out_specs=[
            pl.BlockSpec((TB, C_pad),  lambda i: (0, 0)),   # packed logits (padded)
            pl.BlockSpec((B, G),       lambda i: (0, 0)),   # final hidden  (padded)
        ],
        scratch_shapes=[
            pltpu.VMEM((TB, G), jnp.float32),               # all hidden states
        ],
    )

    logits_p, h_final_p = pl.pallas_call(
        char_decoder_kernel,
        out_shape=(jax.ShapeDtypeStruct((TB, C_pad), jnp.float32),
                   jax.ShapeDtypeStruct((B, G), jnp.float32)),
        grid_spec=grid_spec,
        compiler_params=pltpu.CompilerParams(
            dimension_semantics=("arbitrary",)),            # serial recurrence
    )(ids_flat, word_emb,
      w_h2h_p, b_h2h_p, w_eff, b_i_eff, b_hn_p, w_h_p, w_out_p, b_out_p)

    decoded_data = logits_p[:, :C]        # PackedSequence.data (batch_sizes=[B]*T)
    hidden = h_final_p[:, :H][None]       # [1, B, H], like torch GRU hidden
    return decoded_data, hidden


def reference_forward(params, word_emb, ids):
    """Plain-JAX reference, mirrors the PyTorch forward exactly."""
    T, B, _ = ids.shape
    C = params["emb"].shape[0]
    h = jnp.maximum(word_emb @ params["w_h2h"] + params["b_h2h"], 0.0)
    outs = []
    for t in range(T):
        x = params["emb"][ids[t, :, 0]]
        gi_r = x @ params["w_i"][0] + params["b_i"][0]
        gi_z = x @ params["w_i"][1] + params["b_i"][1]
        gi_n = x @ params["w_i"][2] + params["b_i"][2]
        gh_r = h @ params["w_h"][0] + params["b_h"][0]
        gh_z = h @ params["w_h"][1] + params["b_h"][1]
        gh_n = h @ params["w_h"][2] + params["b_h"][2]
        r = jax.nn.sigmoid(gi_r + gh_r)
        z = jax.nn.sigmoid(gi_z + gh_z)
        n = jnp.tanh(gi_n + r * gh_n)
        h = (1.0 - z) * n + z * h
        outs.append(h @ params["w_out"] + params["b_out"])
    return jnp.stack(outs, 0).reshape(T * B, C), h[None]


def init_params(key, hidden_size, char_count, char_embedding_size,
                input_embedding_size):
    ks = jax.random.split(key, 9)
    s = 0.1
    f32 = jnp.float32
    return {
        "w_h2h": s * jax.random.normal(ks[0], (input_embedding_size, hidden_size), f32),
        "b_h2h": s * jax.random.normal(ks[1], (1, hidden_size), f32),
        "emb":   s * jax.random.normal(ks[2], (char_count, char_embedding_size), f32),
        "w_i":   s * jax.random.normal(ks[3], (3, char_embedding_size, hidden_size), f32),
        "b_i":   s * jax.random.normal(ks[4], (3, 1, hidden_size), f32),
        "w_h":   s * jax.random.normal(ks[5], (3, hidden_size, hidden_size), f32),
        "b_h":   s * jax.random.normal(ks[6], (3, 1, hidden_size), f32),
        "w_out": s * jax.random.normal(ks[7], (hidden_size, char_count), f32),
        "b_out": s * jax.random.normal(ks[8], (1, char_count), f32),
    }


if __name__ == "__main__":
    # Module hyper-params (constructor args of CharDecoderRNN), small & rounded.
    H, C, E, IE = 32, 32, 64, 128      # hidden, char_count, char_emb, input_emb
    B, T = 8, 8                        # batch, sequence length

    key = jax.random.PRNGKey(0)
    pk, wk, ik = jax.random.split(key, 3)
    params = init_params(pk, H, C, E, IE)
    word_emb = jax.random.normal(wk, (B, IE), jnp.float32)
    char_ids = jax.random.randint(ik, (T, B, 1), 0, C, jnp.int32)

    decoded, hidden = char_decoder_forward(params, word_emb, char_ids)
    decoded, hidden = jax.block_until_ready((decoded, hidden))

    ref_decoded, ref_hidden = reference_forward(params, word_emb, char_ids)
    assert decoded.shape == (T * B, C) and hidden.shape == (1, B, H)
    assert jnp.allclose(decoded, ref_decoded, atol=1e-4, rtol=1e-4)
    assert jnp.allclose(hidden, ref_hidden, atol=1e-4, rtol=1e-4)
    print("KERNEL_OK")
</pallas_src>

<mosaic_0001>
module attributes {stable_mosaic.version = 11 : i64} {
  func.func @char_decoder_kernel(%arg0: i32, %arg1: memref<64x1xi32, #tpu.memory_space<vmem>>, %arg2: memref<8x128xf32, #tpu.memory_space<vmem>>, %arg3: memref<128x128xf32, #tpu.memory_space<vmem>>, %arg4: memref<1x128xf32, #tpu.memory_space<vmem>>, %arg5: memref<32x384xf32, #tpu.memory_space<vmem>>, %arg6: memref<1x384xf32, #tpu.memory_space<vmem>>, %arg7: memref<1x128xf32, #tpu.memory_space<vmem>>, %arg8: memref<128x384xf32, #tpu.memory_space<vmem>>, %arg9: memref<128x128xf32, #tpu.memory_space<vmem>>, %arg10: memref<1x128xf32, #tpu.memory_space<vmem>>, %arg11: memref<64x128xf32, #tpu.memory_space<vmem>>, %arg12: memref<8x128xf32, #tpu.memory_space<vmem>>, %arg13: memref<64x128xf32, #tpu.memory_space<vmem>>) attributes {dimension_semantics = [#tpu.dimension_semantics<arbitrary>], iteration_bounds = array<i64: 1>, scalar_prefetch = 0 : i64, scratch_operands = 1 : i64, tpu.core_type = #tpu.core_type<tc>, window_params = [{pipeline_mode = #tpu.pipeline_mode<synchronous>, transform_indices = @transform_0, window_bounds = array<i64: 64, 1>}, {pipeline_mode = #tpu.pipeline_mode<synchronous>, transform_indices = @transform_1, window_bounds = array<i64: 8, 128>}, {pipeline_mode = #tpu.pipeline_mode<synchronous>, transform_indices = @transform_2, window_bounds = array<i64: 128, 128>}, {pipeline_mode = #tpu.pipeline_mode<synchronous>, transform_indices = @transform_3, window_bounds = array<i64: 1, 128>}, {pipeline_mode = #tpu.pipeline_mode<synchronous>, transform_indices = @transform_4, window_bounds = array<i64: 32, 384>}, {pipeline_mode = #tpu.pipeline_mode<synchronous>, transform_indices = @transform_5, window_bounds = array<i64: 1, 384>}, {pipeline_mode = #tpu.pipeline_mode<synchronous>, transform_indices = @transform_6, window_bounds = array<i64: 1, 128>}, {pipeline_mode = #tpu.pipeline_mode<synchronous>, transform_indices = @transform_7, window_bounds = array<i64: 128, 384>}, {pipeline_mode = #tpu.pipeline_mode<synchronous>, transform_indices = @transform_8, window_bounds = array<i64: 128, 128>}, {pipeline_mode = #tpu.pipeline_mode<synchronous>, transform_indices = @transform_9, window_bounds = array<i64: 1, 128>}, {pipeline_mode = #tpu.pipeline_mode<synchronous>, transform_indices = @transform_10, window_bounds = array<i64: 64, 128>}, {pipeline_mode = #tpu.pipeline_mode<synchronous>, transform_indices = @transform_11, window_bounds = array<i64: 8, 128>}]} {
    %c0 = arith.constant 0 : index
    %c0_0 = arith.constant 0 : index
    %0 = vector.load %arg2[%c0, %c0_0] : memref<8x128xf32, #tpu.memory_space<vmem>>, vector<8x128xf32>
    %c0_1 = arith.constant 0 : index
    %c0_2 = arith.constant 0 : index
    %1 = vector.load %arg3[%c0_1, %c0_2] : memref<128x128xf32, #tpu.memory_space<vmem>>, vector<128x128xf32>
    %cst = arith.constant dense<0.000000e+00> : vector<8x128xf32>
    %2 = tpu.matmul %0, %1, %cst {dimension_numbers = #tpu.dot_dimension_numbers<[1], [0], [0], [1], [0, 0, 1, 1], [], []>} : vector<8x128xf32>, vector<128x128xf32>, vector<8x128xf32> -> vector<8x128xf32>
    %c0_3 = arith.constant 0 : index
    %c0_4 = arith.constant 0 : index
    %3 = vector.load %arg4[%c0_3, %c0_4] : memref<1x128xf32, #tpu.memory_space<vmem>>, vector<1x128xf32>
    %4 = vector.broadcast %3 : vector<1x128xf32> to vector<8x128xf32>
    %5 = arith.addf %2, %4 : vector<8x128xf32>
    %cst_5 = arith.constant 0.000000e+00 : f32
    %6 = vector.broadcast %cst_5 : f32 to vector<8x128xf32>
    %7 = arith.maximumf %5, %6 : vector<8x128xf32>
    %c0_6 = arith.constant 0 : index
    %c0_7 = arith.constant 0 : index
    %8 = vector.load %arg1[%c0_6, %c0_7] : memref<64x1xi32, #tpu.memory_space<vmem>>, vector<64x1xi32>
    %9 = tpu.iota {dimensions = array<i32: 1>} : vector<64x32xi32>
    %10 = vector.broadcast %8 : vector<64x1xi32> to vector<64x32xi32>
    %11 = arith.cmpi eq, %10, %9 : vector<64x32xi32>
    %12 = arith.extui %11 : vector<64x32xi1> to vector<64x32xi32>
    %13 = arith.sitofp %12 : vector<64x32xi32> to vector<64x32xf32>
    %c0_8 = arith.constant 0 : index
    %c0_9 = arith.constant 0 : index
    %14 = vector.load %arg5[%c0_8, %c0_9] : memref<32x384xf32, #tpu.memory_space<vmem>>, vector<32x384xf32>
    %cst_10 = arith.constant dense<0.000000e+00> : vector<64x384xf32>
    %15 = tpu.matmul %13, %14, %cst_10 {dimension_numbers = #tpu.dot_dimension_numbers<[1], [0], [0], [1], [0, 0, 1, 1], [], []>} : vector<64x32xf32>, vector<32x384xf32>, vector<64x384xf32> -> vector<64x384xf32>
    %c0_11 = arith.constant 0 : index
    %c0_12 = arith.constant 0 : index
    %16 = vector.load %arg6[%c0_11, %c0_12] : memref<1x384xf32, #tpu.memory_space<vmem>>, vector<1x384xf32>
    %17 = vector.broadcast %16 : vector<1x384xf32> to vector<64x384xf32>
    %18 = arith.addf %15, %17 : vector<64x384xf32>
    %c0_13 = arith.constant 0 : index
    %c0_14 = arith.constant 0 : index
    %19 = vector.load %arg8[%c0_13, %c0_14] : memref<128x384xf32, #tpu.memory_space<vmem>>, vector<128x384xf32>
    %c0_15 = arith.constant 0 : index
    %c0_16 = arith.constant 0 : index
    %20 = vector.load %arg7[%c0_15, %c0_16] : memref<1x128xf32, #tpu.memory_space<vmem>>, vector<1x128xf32>
    %21 = vector.shape_cast %20 : vector<1x128xf32> to vector<1x128xf32>
    %22 = vector.broadcast %21 : vector<1x128xf32> to vector<8x128xf32>
    %23 = vector.extract_strided_slice %18 {offsets = [0, 0], sizes = [8, 384], strides = [1, 1]} : vector<64x384xf32> to vector<8x384xf32>
    %cst_17 = arith.constant dense<0.000000e+00> : vector<8x384xf32>
    %24 = tpu.matmul %7, %19, %cst_17 {dimension_numbers = #tpu.dot_dimension_numbers<[1], [0], [0], [1], [0, 0, 1, 1], [], []>} : vector<8x128xf32>, vector<128x384xf32>, vector<8x384xf32> -> vector<8x384xf32>
    %25 = vector.extract_strided_slice %23 {offsets = [0, 0], sizes = [8, 128], strides = [1, 1]} : vector<8x384xf32> to vector<8x128xf32>
    %26 = vector.extract_strided_slice %24 {offsets = [0, 0], sizes = [8, 128], strides = [1, 1]} : vector<8x384xf32> to vector<8x128xf32>
    %27 = arith.addf %25, %26 : vector<8x128xf32>
    %cst_18 = arith.constant 5.000000e-01 : f32
    %28 = vector.broadcast %cst_18 : f32 to vector<8x128xf32>
    %29 = arith.mulf %28, %27 : vector<8x128xf32>
    %30 = math.tanh %29 : vector<8x128xf32>
    %cst_19 = arith.constant 1.000000e+00 : f32
    %31 = vector.broadcast %cst_19 : f32 to vector<8x128xf32>
    %32 = arith.addf %30, %31 : vector<8x128xf32>
    %cst_20 = arith.constant 5.000000e-01 : f32
    %33 = vector.broadcast %cst_20 : f32 to vector<8x128xf32>
    %34 = arith.mulf %33, %32 : vector<8x128xf32>
    %35 = vector.extract_strided_slice %23 {offsets = [0, 128], sizes = [8, 128], strides = [1, 1]} : vector<8x384xf32> to vector<8x128xf32>
    %36 = vector.extract_strided_slice %24 {offsets = [0, 128], sizes = [8, 128], strides = [1, 1]} : vector<8x384xf32> to vector<8x128xf32>
    %37 = arith.addf %35, %36 : vector<8x128xf32>
    %cst_21 = arith.constant 5.000000e-01 : f32
    %38 = vector.broadcast %cst_21 : f32 to vector<8x128xf32>
    %39 = arith.mulf %38, %37 : vector<8x128xf32>
    %40 = math.tanh %39 : vector<8x128xf32>
    %cst_22 = arith.constant 1.000000e+00 : f32
    %41 = vector.broadcast %cst_22 : f32 to vector<8x128xf32>
    %42 = arith.addf %40, %41 : vector<8x128xf32>
    %cst_23 = arith.constant 5.000000e-01 : f32
    %43 = vector.broadcast %cst_23 : f32 to vector<8x128xf32>
    %44 = arith.mulf %43, %42 : vector<8x128xf32>
    %45 = vector.extract_strided_slice %23 {offsets = [0, 256], sizes = [8, 128], strides = [1, 1]} : vector<8x384xf32> to vector<8x128xf32>
    %46 = vector.extract_strided_slice %24 {offsets = [0, 256], sizes = [8, 128], strides = [1, 1]} : vector<8x384xf32> to vector<8x128xf32>
    %47 = arith.addf %46, %22 : vector<8x128xf32>
    %48 = arith.mulf %34, %47 : vector<8x128xf32>
    %49 = arith.addf %45, %48 : vector<8x128xf32>
    %50 = math.tanh %49 : vector<8x128xf32>
    %cst_24 = arith.constant 1.000000e+00 : f32
    %51 = vector.broadcast %cst_24 : f32 to vector<8x128xf32>
    %52 = arith.subf %51, %44 : vector<8x128xf32>
    %53 = arith.mulf %52, %50 : vector<8x128xf32>
    %54 = arith.mulf %44, %7 : vector<8x128xf32>
    %55 = arith.addf %53, %54 : vector<8x128xf32>
    %c0_25 = arith.constant 0 : index
    %c0_26 = arith.constant 0 : index
    %56 = vector.load %arg13[%c0_25, %c0_26] : memref<64x128xf32, #tpu.memory_space<vmem>>, vector<8x128xf32>
    tpu.vector_store %arg13[%c0_25, %c0_26], %55 {strides = array<i32>} : memref<64x128xf32, #tpu.memory_space<vmem>>, vector<8x128xf32>,
    %57 = vector.extract_strided_slice %18 {offsets = [8, 0], sizes = [8, 384], strides = [1, 1]} : vector<64x384xf32> to vector<8x384xf32>
    %cst_27 = arith.constant dense<0.000000e+00> : vector<8x384xf32>
    %58 = tpu.matmul %55, %19, %cst_27 {dimension_numbers = #tpu.dot_dimension_numbers<[1], [0], [0], [1], [0, 0, 1, 1], [], []>} : vector<8x128xf32>, vector<128x384xf32>, vector<8x384xf32> -> vector<8x384xf32>
    %59 = vector.extract_strided_slice %57 {offsets = [0, 0], sizes = [8, 128], strides = [1, 1]} : vector<8x384xf32> to vector<8x128xf32>
    %60 = vector.extract_strided_slice %58 {offsets = [0, 0], sizes = [8, 128], strides = [1, 1]} : vector<8x384xf32> to vector<8x128xf32>
    %61 = arith.addf %59, %60 : vector<8x128xf32>
    %cst_28 = arith.constant 5.000000e-01 : f32
    %62 = vector.broadcast %cst_28 : f32 to vector<8x128xf32>
    %63 = arith.mulf %62, %61 : vector<8x128xf32>
    %64 = math.tanh %63 : vector<8x128xf32>
    %cst_29 = arith.constant 1.000000e+00 : f32
    %65 = vector.broadcast %cst_29 : f32 to vector<8x128xf32>
    %66 = arith.addf %64, %65 : vector<8x128xf32>
    %cst_30 = arith.constant 5.000000e-01 : f32
    %67 = vector.broadcast %cst_30 : f32 to vector<8x128xf32>
    %68 = arith.mulf %67, %66 : vector<8x128xf32>
    %69 = vector.extract_strided_slice %57 {offsets = [0, 128], sizes = [8, 128], strides = [1, 1]} : vector<8x384xf32> to vector<8x128xf32>
    %70 = vector.extract_strided_slice %58 {offsets = [0, 128], sizes = [8, 128], strides = [1, 1]} : vector<8x384xf32> to vector<8x128xf32>
    %71 = arith.addf %69, %70 : vector<8x128xf32>
    %cst_31 = arith.constant 5.000000e-01 : f32
    %72 = vector.broadcast %cst_31 : f32 to vector<8x128xf32>
    %73 = arith.mulf %72, %71 : vector<8x128xf32>
    %74 = math.tanh %73 : vector<8x128xf32>
    %cst_32 = arith.constant 1.000000e+00 : f32
    %75 = vector.broadcast %cst_32 : f32 to vector<8x128xf32>
    %76 = arith.addf %74, %75 : vector<8x128xf32>
    %cst_33 = arith.constant 5.000000e-01 : f32
    %77 = vector.broadcast %cst_33 : f32 to vector<8x128xf32>
    %78 = arith.mulf %77, %76 : vector<8x128xf32>
    %79 = vector.extract_strided_slice %57 {offsets = [0, 256], sizes = [8, 128], strides = [1, 1]} : vector<8x384xf32> to vector<8x128xf32>
    %80 = vector.extract_strided_slice %58 {offsets = [0, 256], sizes = [8, 128], strides = [1, 1]} : vector<8x384xf32> to vector<8x128xf32>
    %81 = arith.addf %80, %22 : vector<8x128xf32>
    %82 = arith.mulf %68, %81 : vector<8x128xf32>
    %83 = arith.addf %79, %82 : vector<8x128xf32>
    %84 = math.tanh %83 : vector<8x128xf32>
    %cst_34 = arith.constant 1.000000e+00 : f32
    %85 = vector.broadcast %cst_34 : f32 to vector<8x128xf32>
    %86 = arith.subf %85, %78 : vector<8x128xf32>
    %87 = arith.mulf %86, %84 : vector<8x128xf32>
    %88 = arith.mulf %78, %55 : vector<8x128xf32>
    %89 = arith.addf %87, %88 : vector<8x128xf32>
    %c8 = arith.constant 8 : index
    %c0_35 = arith.constant 0 : index
    %90 = vector.load %arg13[%c8, %c0_35] : memref<64x128xf32, #tpu.memory_space<vmem>>, vector<8x128xf32>
    tpu.vector_store %arg13[%c8, %c0_35], %89 {strides = array<i32>} : memref<64x128xf32, #tpu.memory_space<vmem>>, vector<8x128xf32>,
    %91 = vector.extract_strided_slice %18 {offsets = [16, 0], sizes = [8, 384], strides = [1, 1]} : vector<64x384xf32> to vector<8x384xf32>
    %cst_36 = arith.constant dense<0.000000e+00> : vector<8x384xf32>
    %92 = tpu.matmul %89, %19, %cst_36 {dimension_numbers = #tpu.dot_dimension_numbers<[1], [0], [0], [1], [0, 0, 1, 1], [], []>} : vector<8x128xf32>, vector<128x384xf32>, vector<8x384xf32> -> vector<8x384xf32>
    %93 = vector.extract_strided_slice %91 {offsets = [0, 0], sizes = [8, 128], strides = [1, 1]} : vector<8x384xf32> to vector<8x128xf32>
    %94 = vector.extract_strided_slice %92 {offsets = [0, 0], sizes = [8, 128], strides = [1, 1]} : vector<8x384xf32> to vector<8x128xf32>
    %95 = arith.addf %93, %94 : vector<8x128xf32>
    %cst_37 = arith.constant 5.000000e-01 : f32
    %96 = vector.broadcast %cst_37 : f32 to vector<8x128xf32>
    %97 = arith.mulf %96, %95 : vector<8x128xf32>
    %98 = math.tanh %97 : vector<8x128xf32>
    %cst_38 = arith.constant 1.000000e+00 : f32
    %99 = vector.broadcast %cst_38 : f32 to vector<8x128xf32>
    %100 = arith.addf %98, %99 : vector<8x128xf32>
    %cst_39 = arith.constant 5.000000e-01 : f32
    %101 = vector.broadcast %cst_39 : f32 to vector<8x128xf32>
    %102 = arith.mulf %101, %100 : vector<8x128xf32>
    %103 = vector.extract_strided_slice %91 {offsets = [0, 128], sizes = [8, 128], strides = [1, 1]} : vector<8x384xf32> to vector<8x128xf32>
    %104 = vector.extract_strided_slice %92 {offsets = [0, 128], sizes = [8, 128], strides = [1, 1]} : vector<8x384xf32> to vector<8x128xf32>
    %105 = arith.addf %103, %104 : vector<8x128xf32>
    %cst_40 = arith.constant 5.000000e-01 : f32
    %106 = vector.broadcast %cst_40 : f32 to vector<8x128xf32>
    %107 = arith.mulf %106, %105 : vector<8x128xf32>
    %108 = math.tanh %107 : vector<8x128xf32>
    %cst_41 = arith.constant 1.000000e+00 : f32
    %109 = vector.broadcast %cst_41 : f32 to vector<8x128xf32>
    %110 = arith.addf %108, %109 : vector<8x128xf32>
    %cst_42 = arith.constant 5.000000e-01 : f32
    %111 = vector.broadcast %cst_42 : f32 to vector<8x128xf32>
    %112 = arith.mulf %111, %110 : vector<8x128xf32>
    %113 = vector.extract_strided_slice %91 {offsets = [0, 256], sizes = [8, 128], strides = [1, 1]} : vector<8x384xf32> to vector<8x128xf32>
    %114 = vector.extract_strided_slice %92 {offsets = [0, 256], sizes = [8, 128], strides = [1, 1]} : vector<8x384xf32> to vector<8x128xf32>
    %115 = arith.addf %114, %22 : vector<8x128xf32>
    %116 = arith.mulf %102, %115 : vector<8x128xf32>
    %117 = arith.addf %113, %116 : vector<8x128xf32>
    %118 = math.tanh %117 : vector<8x128xf32>
    %cst_43 = arith.constant 1.000000e+00 : f32
    %119 = vector.broadcast %cst_43 : f32 to vector<8x128xf32>
    %120 = arith.subf %119, %112 : vector<8x128xf32>
    %121 = arith.mulf %120, %118 : vector<8x128xf32>
    %122 = arith.mulf %112, %89 : vector<8x128xf32>
    %123 = arith.addf %121, %122 : vector<8x128xf32>
    %c16 = arith.constant 16 : index
    %c0_44 = arith.constant 0 : index
    %124 = vector.load %arg13[%c16, %c0_44] : memref<64x128xf32, #tpu.memory_space<vmem>>, vector<8x128xf32>
    tpu.vector_store %arg13[%c16, %c0_44], %123 {strides = array<i32>} : memref<64x128xf32, #tpu.memory_space<vmem>>, vector<8x128xf32>,
    %125 = vector.extract_strided_slice %18 {offsets = [24, 0], sizes = [8, 384], strides = [1, 1]} : vector<64x384xf32> to vector<8x384xf32>
    %cst_45 = arith.constant dense<0.000000e+00> : vector<8x384xf32>
    %126 = tpu.matmul %123, %19, %cst_45 {dimension_numbers = #tpu.dot_dimension_numbers<[1], [0], [0], [1], [0, 0, 1, 1], [], []>} : vector<8x128xf32>, vector<128x384xf32>, vector<8x384xf32> -> vector<8x384xf32>
    %127 = vector.extract_strided_slice %125 {offsets = [0, 0], sizes = [8, 128], strides = [1, 1]} : vector<8x384xf32> to vector<8x128xf32>
    %128 = vector.extract_strided_slice %126 {offsets = [0, 0], sizes = [8, 128], strides = [1, 1]} : vector<8x384xf32> to vector<8x128xf32>
    %129 = arith.addf %127, %128 : vector<8x128xf32>
    %cst_46 = arith.constant 5.000000e-01 : f32
    %130 = vector.broadcast %cst_46 : f32 to vector<8x128xf32>
    %131 = arith.mulf %130, %129 : vector<8x128xf32>
    %132 = math.tanh %131 : vector<8x128xf32>
    %cst_47 = arith.constant 1.000000e+00 : f32
    %133 = vector.broadcast %cst_47 : f32 to vector<8x128xf32>
    %134 = arith.addf %132, %133 : vector<8x128xf32>
    %cst_48 = arith.constant 5.000000e-01 : f32
    %135 = vector.broadcast %cst_48 : f32 to vector<8x128xf32>
    %136 = arith.mulf %135, %134 : vector<8x128xf32>
    %137 = vector.extract_strided_slice %125 {offsets = [0, 128], sizes = [8, 128], strides = [1, 1]} : vector<8x384xf32> to vector<8x128xf32>
    %138 = vector.extract_strided_slice %126 {offsets = [0, 128], sizes = [8, 128], strides = [1, 1]} : vector<8x384xf32> to vector<8x128xf32>
    %139 = arith.addf %137, %138 : vector<8x128xf32>
    %cst_49 = arith.constant 5.000000e-01 : f32
    %140 = vector.broadcast %cst_49 : f32 to vector<8x128xf32>
    %141 = arith.mulf %140, %139 : vector<8x128xf32>
    %142 = math.tanh %141 : vector<8x128xf32>
    %cst_50 = arith.constant 1.000000e+00 : f32
    %143 = vector.broadcast %cst_50 : f32 to vector<8x128xf32>
    %144 = arith.addf %142, %143 : vector<8x128xf32>
    %cst_51 = arith.constant 5.000000e-01 : f32
    %145 = vector.broadcast %cst_51 : f32 to vector<8x128xf32>
    %146 = arith.mulf %145, %144 : vector<8x128xf32>
    %147 = vector.extract_strided_slice %125 {offsets = [0, 256], sizes = [8, 128], strides = [1, 1]} : vector<8x384xf32> to vector<8x128xf32>
    %148 = vector.extract_strided_slice %126 {offsets = [0, 256], sizes = [8, 128], strides = [1, 1]} : vector<8x384xf32> to vector<8x128xf32>
    %149 = arith.addf %148, %22 : vector<8x128xf32>
    %150 = arith.mulf %136, %149 : vector<8x128xf32>
    %151 = arith.addf %147, %150 : vector<8x128xf32>
    %152 = math.tanh %151 : vector<8x128xf32>
    %cst_52 = arith.constant 1.000000e+00 : f32
    %153 = vector.broadcast %cst_52 : f32 to vector<8x128xf32>
    %154 = arith.subf %153, %146 : vector<8x128xf32>
    %155 = arith.mulf %154, %152 : vector<8x128xf32>
    %156 = arith.mulf %146, %123 : vector<8x128xf32>
    %157 = arith.addf %155, %156 : vector<8x128xf32>
    %c24 = arith.constant 24 : index
    %c0_53 = arith.constant 0 : index
    %158 = vector.load %arg13[%c24, %c0_53] : memref<64x128xf32, #tpu.memory_space<vmem>>, vector<8x128xf32>
    tpu.vector_store %arg13[%c24, %c0_53], %157 {strides = array<i32>} : memref<64x128xf32, #tpu.memory_space<vmem>>, vector<8x128xf32>,
    %159 = vector.extract_strided_slice %18 {offsets = [32, 0], sizes = [8, 384], strides = [1, 1]} : vector<64x384xf32> to vector<8x384xf32>
    %cst_54 = arith.constant dense<0.000000e+00> : vector<8x384xf32>
    %160 = tpu.matmul %157, %19, %cst_54 {dimension_numbers = #tpu.dot_dimension_numbers<[1], [0], [0], [1], [0, 0, 1, 1], [], []>} : vector<8x128xf32>, vector<128x384xf32>, vector<8x384xf32> -> vector<8x384xf32>
    %161 = vector.extract_strided_slice %159 {offsets = [0, 0], sizes = [8, 128], strides = [1, 1]} : vector<8x384xf32> to vector<8x128xf32>
    %162 = vector.extract_strided_slice %160 {offsets = [0, 0], sizes = [8, 128], strides = [1, 1]} : vector<8x384xf32> to vector<8x128xf32>
    %163 = arith.addf %161, %162 : vector<8x128xf32>
    %cst_55 = arith.constant 5.000000e-01 : f32
    %164 = vector.broadcast %cst_55 : f32 to vector<8x128xf32>
    %165 = arith.mulf %164, %163 : vector<8x128xf32>
    %166 = math.tanh %165 : vector<8x128xf32>
    %cst_56 = arith.constant 1.000000e+00 : f32
    %167 = vector.broadcast %cst_56 : f32 to vector<8x128xf32>
    %168 = arith.addf %166, %167 : vector<8x128xf32>
    %cst_57 = arith.constant 5.000000e-01 : f32
    %169 = vector.broadcast %cst_57 : f32 to vector<8x128xf32>
    %170 = arith.mulf %169, %168 : vector<8x128xf32>
    %171 = vector.extract_strided_slice %159 {offsets = [0, 128], sizes = [8, 128], strides = [1, 1]} : vector<8x384xf32> to vector<8x128xf32>
    %172 = vector.extract_strided_slice %160 {offsets = [0, 128], sizes = [8, 128], strides = [1, 1]} : vector<8x384xf32> to vector<8x128xf32>
    %173 = arith.addf %171, %172 : vector<8x128xf32>
    %cst_58 = arith.constant 5.000000e-01 : f32
    %174 = vector.broadcast %cst_58 : f32 to vector<8x128xf32>
    %175 = arith.mulf %174, %173 : vector<8x128xf32>
    %176 = math.tanh %175 : vector<8x128xf32>
    %cst_59 = arith.constant 1.000000e+00 : f32
    %177 = vector.broadcast %cst_59 : f32 to vector<8x128xf32>
    %178 = arith.addf %176, %177 : vector<8x128xf32>
    %cst_60 = arith.constant 5.000000e-01 : f32
    %179 = vector.broadcast %cst_60 : f32 to vector<8x128xf32>
    %180 = arith.mulf %179, %178 : vector<8x128xf32>
    %181 = vector.extract_strided_slice %159 {offsets = [0, 256], sizes = [8, 128], strides = [1, 1]} : vector<8x384xf32> to vector<8x128xf32>
    %182 = vector.extract_strided_slice %160 {offsets = [0, 256], sizes = [8, 128], strides = [1, 1]} : vector<8x384xf32> to vector<8x128xf32>
    %183 = arith.addf %182, %22 : vector<8x128xf32>
    %184 = arith.mulf %170, %183 : vector<8x128xf32>
    %185 = arith.addf %181, %184 : vector<8x128xf32>
    %186 = math.tanh %185 : vector<8x128xf32>
    %cst_61 = arith.constant 1.000000e+00 : f32
    %187 = vector.broadcast %cst_61 : f32 to vector<8x128xf32>
    %188 = arith.subf %187, %180 : vector<8x128xf32>
    %189 = arith.mulf %188, %186 : vector<8x128xf32>
    %190 = arith.mulf %180, %157 : vector<8x128xf32>
    %191 = arith.addf %189, %190 : vector<8x128xf32>
    %c32 = arith.constant 32 : index
    %c0_62 = arith.constant 0 : index
    %192 = vector.load %arg13[%c32, %c0_62] : memref<64x128xf32, #tpu.memory_space<vmem>>, vector<8x128xf32>
    tpu.vector_store %arg13[%c32, %c0_62], %191 {strides = array<i32>} : memref<64x128xf32, #tpu.memory_space<vmem>>, vector<8x128xf32>,
    %193 = vector.extract_strided_slice %18 {offsets = [40, 0], sizes = [8, 384], strides = [1, 1]} : vector<64x384xf32> to vector<8x384xf32>
    %cst_63 = arith.constant dense<0.000000e+00> : vector<8x384xf32>
    %194 = tpu.matmul %191, %19, %cst_63 {dimension_numbers = #tpu.dot_dimension_numbers<[1], [0], [0], [1], [0, 0, 1, 1], [], []>} : vector<8x128xf32>, vector<128x384xf32>, vector<8x384xf32> -> vector<8x384xf32>
    %195 = vector.extract_strided_slice %193 {offsets = [0, 0], sizes = [8, 128], strides = [1, 1]} : vector<8x384xf32> to vector<8x128xf32>
    %196 = vector.extract_strided_slice %194 {offsets = [0, 0], sizes = [8, 128], strides = [1, 1]} : vector<8x384xf32> to vector<8x128xf32>
    %197 = arith.addf %195, %196 : vector<8x128xf32>
    %cst_64 = arith.constant 5.000000e-01 : f32
    %198 = vector.broadcast %cst_64 : f32 to vector<8x128xf32>
    %199 = arith.mulf %198, %197 : vector<8x128xf32>
    %200 = math.tanh %199 : vector<8x128xf32>
    %cst_65 = arith.constant 1.000000e+00 : f32
    %201 = vector.broadcast %cst_65 : f32 to vector<8x128xf32>
    %202 = arith.addf %200, %201 : vector<8x128xf32>
    %cst_66 = arith.constant 5.000000e-01 : f32
    %203 = vector.broadcast %cst_66 : f32 to vector<8x128xf32>
    %204 = arith.mulf %203, %202 : vector<8x128xf32>
    %205 = vector.extract_strided_slice %193 {offsets = [0, 128], sizes = [8, 128], strides = [1, 1]} : vector<8x384xf32> to vector<8x128xf32>
    %206 = vector.extract_strided_slice %194 {offsets = [0, 128], sizes = [8, 128], strides = [1, 1]} : vector<8x384xf32> to vector<8x128xf32>
    %207 = arith.addf %205, %206 : vector<8x128xf32>
    %cst_67 = arith.constant 5.000000e-01 : f32
    %208 = vector.broadcast %cst_67 : f32 to vector<8x128xf32>
    %209 = arith.mulf %208, %207 : vector<8x128xf32>
    %210 = math.tanh %209 : vector<8x128xf32>
    %cst_68 = arith.constant 1.000000e+00 : f32
    %211 = vector.broadcast %cst_68 : f32 to vector<8x128xf32>
    %212 = arith.addf %210, %211 : vector<8x128xf32>
    %cst_69 = arith.constant 5.000000e-01 : f32
    %213 = vector.broadcast %cst_69 : f32 to vector<8x128xf32>
    %214 = arith.mulf %213, %212 : vector<8x128xf32>
    %215 = vector.extract_strided_slice %193 {offsets = [0, 256], sizes = [8, 128], strides = [1, 1]} : vector<8x384xf32> to vector<8x128xf32>
    %216 = vector.extract_strided_slice %194 {offsets = [0, 256], sizes = [8, 128], strides = [1, 1]} : vector<8x384xf32> to vector<8x128xf32>
    %217 = arith.addf %216, %22 : vector<8x128xf32>
    %218 = arith.mulf %204, %217 : vector<8x128xf32>
    %219 = arith.addf %215, %218 : vector<8x128xf32>
    %220 = math.tanh %219 : vector<8x128xf32>
    %cst_70 = arith.constant 1.000000e+00 : f32
    %221 = vector.broadcast %cst_70 : f32 to vector<8x128xf32>
    %222 = arith.subf %221, %214 : vector<8x128xf32>
    %223 = arith.mulf %222, %220 : vector<8x128xf32>
    %224 = arith.mulf %214, %191 : vector<8x128xf32>
    %225 = arith.addf %223, %224 : vector<8x128xf32>
    %c40 = arith.constant 40 : index
    %c0_71 = arith.constant 0 : index
    %226 = vector.load %arg13[%c40, %c0_71] : memref<64x128xf32, #tpu.memory_space<vmem>>, vector<8x128xf32>
    tpu.vector_store %arg13[%c40, %c0_71], %225 {strides = array<i32>} : memref<64x128xf32, #tpu.memory_space<vmem>>, vector<8x128xf32>,
    %227 = vector.extract_strided_slice %18 {offsets = [48, 0], sizes = [8, 384], strides = [1, 1]} : vector<64x384xf32> to vector<8x384xf32>
    %cst_72 = arith.constant dense<0.000000e+00> : vector<8x384xf32>
    %228 = tpu.matmul %225, %19, %cst_72 {dimension_numbers = #tpu.dot_dimension_numbers<[1], [0], [0], [1], [0, 0, 1, 1], [], []>} : vector<8x128xf32>, vector<128x384xf32>, vector<8x384xf32> -> vector<8x384xf32>
    %229 = vector.extract_strided_slice %227 {offsets = [0, 0], sizes = [8, 128], strides = [1, 1]} : vector<8x384xf32> to vector<8x128xf32>
    %230 = vector.extract_strided_slice %228 {offsets = [0, 0], sizes = [8, 128], strides = [1, 1]} : vector<8x384xf32> to vector<8x128xf32>
    %231 = arith.addf %229, %230 : vector<8x128xf32>
    %cst_73 = arith.constant 5.000000e-01 : f32
    %232 = vector.broadcast %cst_73 : f32 to vector<8x128xf32>
    %233 = arith.mulf %232, %231 : vector<8x128xf32>
    %234 = math.tanh %233 : vector<8x128xf32>
    %cst_74 = arith.constant 1.000000e+00 : f32
    %235 = vector.broadcast %cst_74 : f32 to vector<8x128xf32>
    %236 = arith.addf %234, %235 : vector<8x128xf32>
    %cst_75 = arith.constant 5.000000e-01 : f32
    %237 = vector.broadcast %cst_75 : f32 to vector<8x128xf32>
    %238 = arith.mulf %237, %236 : vector<8x128xf32>
    %239 = vector.extract_strided_slice %227 {offsets = [0, 128], sizes = [8, 128], strides = [1, 1]} : vector<8x384xf32> to vector<8x128xf32>
    %240 = vector.extract_strided_slice %228 {offsets = [0, 128], sizes = [8, 128], strides = [1, 1]} : vector<8x384xf32> to vector<8x128xf32>
    %241 = arith.addf %239, %240 : vector<8x128xf32>
    %cst_76 = arith.constant 5.000000e-01 : f32
    %242 = vector.broadcast %cst_76 : f32 to vector<8x128xf32>
    %243 = arith.mulf %242, %241 : vector<8x128xf32>
    %244 = math.tanh %243 : vector<8x128xf32>
    %cst_77 = arith.constant 1.000000e+00 : f32
    %245 = vector.broadcast %cst_77 : f32 to vector<8x128xf32>
    %246 = arith.addf %244, %245 : vector<8x128xf32>
    %cst_78 = arith.constant 5.000000e-01 : f32
    %247 = vector.broadcast %cst_78 : f32 to vector<8x128xf32>
    %248 = arith.mulf %247, %246 : vector<8x128xf32>
    %249 = vector.extract_strided_slice %227 {offsets = [0, 256], sizes = [8, 128], strides = [1, 1]} : vector<8x384xf32> to vector<8x128xf32>
    %250 = vector.extract_strided_slice %228 {offsets = [0, 256], sizes = [8, 128], strides = [1, 1]} : vector<8x384xf32> to vector<8x128xf32>
    %251 = arith.addf %250, %22 : vector<8x128xf32>
    %252 = arith.mulf %238, %251 : vector<8x128xf32>
    %253 = arith.addf %249, %252 : vector<8x128xf32>
    %254 = math.tanh %253 : vector<8x128xf32>
    %cst_79 = arith.constant 1.000000e+00 : f32
    %255 = vector.broadcast %cst_79 : f32 to vector<8x128xf32>
    %256 = arith.subf %255, %248 : vector<8x128xf32>
    %257 = arith.mulf %256, %254 : vector<8x128xf32>
    %258 = arith.mulf %248, %225 : vector<8x128xf32>
    %259 = arith.addf %257, %258 : vector<8x128xf32>
    %c48 = arith.constant 48 : index
    %c0_80 = arith.constant 0 : index
    %260 = vector.load %arg13[%c48, %c0_80] : memref<64x128xf32, #tpu.memory_space<vmem>>, vector<8x128xf32>
    tpu.vector_store %arg13[%c48, %c0_80], %259 {strides = array<i32>} : memref<64x128xf32, #tpu.memory_space<vmem>>, vector<8x128xf32>,
    %261 = vector.extract_strided_slice %18 {offsets = [56, 0], sizes = [8, 384], strides = [1, 1]} : vector<64x384xf32> to vector<8x384xf32>
    %cst_81 = arith.constant dense<0.000000e+00> : vector<8x384xf32>
    %262 = tpu.matmul %259, %19, %cst_81 {dimension_numbers = #tpu.dot_dimension_numbers<[1], [0], [0], [1], [0, 0, 1, 1], [], []>} : vector<8x128xf32>, vector<128x384xf32>, vector<8x384xf32> -> vector<8x384xf32>
    %263 = vector.extract_strided_slice %261 {offsets = [0, 0], sizes = [8, 128], strides = [1, 1]} : vector<8x384xf32> to vector<8x128xf32>
    %264 = vector.extract_strided_slice %262 {offsets = [0, 0], sizes = [8, 128], strides = [1, 1]} : vector<8x384xf32> to vector<8x128xf32>
    %265 = arith.addf %263, %264 : vector<8x128xf32>
    %cst_82 = arith.constant 5.000000e-01 : f32
    %266 = vector.broadcast %cst_82 : f32 to vector<8x128xf32>
    %267 = arith.mulf %266, %265 : vector<8x128xf32>
    %268 = math.tanh %267 : vector<8x128xf32>
    %cst_83 = arith.constant 1.000000e+00 : f32
    %269 = vector.broadcast %cst_83 : f32 to vector<8x128xf32>
    %270 = arith.addf %268, %269 : vector<8x128xf32>
    %cst_84 = arith.constant 5.000000e-01 : f32
    %271 = vector.broadcast %cst_84 : f32 to vector<8x128xf32>
    %272 = arith.mulf %271, %270 : vector<8x128xf32>
    %273 = vector.extract_strided_slice %261 {offsets = [0, 128], sizes = [8, 128], strides = [1, 1]} : vector<8x384xf32> to vector<8x128xf32>
    %274 = vector.extract_strided_slice %262 {offsets = [0, 128], sizes = [8, 128], strides = [1, 1]} : vector<8x384xf32> to vector<8x128xf32>
    %275 = arith.addf %273, %274 : vector<8x128xf32>
    %cst_85 = arith.constant 5.000000e-01 : f32
    %276 = vector.broadcast %cst_85 : f32 to vector<8x128xf32>
    %277 = arith.mulf %276, %275 : vector<8x128xf32>
    %278 = math.tanh %277 : vector<8x128xf32>
    %cst_86 = arith.constant 1.000000e+00 : f32
    %279 = vector.broadcast %cst_86 : f32 to vector<8x128xf32>
    %280 = arith.addf %278, %279 : vector<8x128xf32>
    %cst_87 = arith.constant 5.000000e-01 : f32
    %281 = vector.broadcast %cst_87 : f32 to vector<8x128xf32>
    %282 = arith.mulf %281, %280 : vector<8x128xf32>
    %283 = vector.extract_strided_slice %261 {offsets = [0, 256], sizes = [8, 128], strides = [1, 1]} : vector<8x384xf32> to vector<8x128xf32>
    %284 = vector.extract_strided_slice %262 {offsets = [0, 256], sizes = [8, 128], strides = [1, 1]} : vector<8x384xf32> to vector<8x128xf32>
    %285 = arith.addf %284, %22 : vector<8x128xf32>
    %286 = arith.mulf %272, %285 : vector<8x128xf32>
    %287 = arith.addf %283, %286 : vector<8x128xf32>
    %288 = math.tanh %287 : vector<8x128xf32>
    %cst_88 = arith.constant 1.000000e+00 : f32
    %289 = vector.broadcast %cst_88 : f32 to vector<8x128xf32>
    %290 = arith.subf %289, %282 : vector<8x128xf32>
    %291 = arith.mulf %290, %288 : vector<8x128xf32>
    %292 = arith.mulf %282, %259 : vector<8x128xf32>
    %293 = arith.addf %291, %292 : vector<8x128xf32>
    %c56 = arith.constant 56 : index
    %c0_89 = arith.constant 0 : index
    %294 = vector.load %arg13[%c56, %c0_89] : memref<64x128xf32, #tpu.memory_space<vmem>>, vector<8x128xf32>
    tpu.vector_store %arg13[%c56, %c0_89], %293 {strides = array<i32>} : memref<64x128xf32, #tpu.memory_space<vmem>>, vector<8x128xf32>,
    %c0_90 = arith.constant 0 : index
    %c0_91 = arith.constant 0 : index
    %295 = vector.load %arg12[%c0_90, %c0_91] : memref<8x128xf32, #tpu.memory_space<vmem>>, vector<8x128xf32>
    tpu.vector_store %arg12[%c0_90, %c0_91], %293 {strides = array<i32>} : memref<8x128xf32, #tpu.memory_space<vmem>>, vector<8x128xf32>,
    %c0_92 = arith.constant 0 : index
    %c0_93 = arith.constant 0 : index
    %296 = vector.load %arg13[%c0_92, %c0_93] : memref<64x128xf32, #tpu.memory_space<vmem>>, vector<64x128xf32>
    %c0_94 = arith.constant 0 : index
    %c0_95 = arith.constant 0 : index
    %297 = vector.load %arg9[%c0_94, %c0_95] : memref<128x128xf32, #tpu.memory_space<vmem>>, vector<128x128xf32>
    %cst_96 = arith.constant dense<0.000000e+00> : vector<64x128xf32>
    %298 = tpu.matmul %296, %297, %cst_96 {dimension_numbers = #tpu.dot_dimension_numbers<[1], [0], [0], [1], [0, 0, 1, 1], [], []>} : vector<64x128xf32>, vector<128x128xf32>, vector<64x128xf32> -> vector<64x128xf32>
    %c0_97 = arith.constant 0 : index
    %c0_98 = arith.constant 0 : index
    %299 = vector.load %arg10[%c0_97, %c0_98] : memref<1x128xf32, #tpu.memory_space<vmem>>, vector<1x128xf32>
    %300 = vector.broadcast %299 : vector<1x128xf32> to vector<64x128xf32>
    %301 = arith.addf %298, %300 : vector<64x128xf32>
    %c0_99 = arith.constant 0 : index
    %c0_100 = arith.constant 0 : index
    %302 = vector.load %arg11[%c0_99, %c0_100] : memref<64x128xf32, #tpu.memory_space<vmem>>, vector<64x128xf32>
    tpu.vector_store %arg11[%c0_99, %c0_100], %301 {strides = array<i32>} : memref<64x128xf32, #tpu.memory_space<vmem>>, vector<64x128xf32>,
    return
  }
  func.func @transform_0(%arg0: i32) -> (i32, i32) {
    %c0_i32 = arith.constant 0 : i32
    %c0_i32_0 = arith.constant 0 : i32
    %c0_i32_1 = arith.constant 0 : i32
    return %c0_i32, %c0_i32_0 : i32, i32
  }
  func.func @transform_1(%arg0: i32) -> (i32, i32) {
    %c0_i32 = arith.constant 0 : i32
    %c0_i32_0 = arith.constant 0 : i32
    %c0_i32_1 = arith.constant 0 : i32
    return %c0_i32, %c0_i32_0 : i32, i32
  }
  func.func @transform_2(%arg0: i32) -> (i32, i32) {
    %c0_i32 = arith.constant 0 : i32
    %c0_i32_0 = arith.constant 0 : i32
    %c0_i32_1 = arith.constant 0 : i32
    return %c0_i32, %c0_i32_0 : i32, i32
  }
  func.func @transform_3(%arg0: i32) -> (i32, i32) {
    %c0_i32 = arith.constant 0 : i32
    %c0_i32_0 = arith.constant 0 : i32
    %c0_i32_1 = arith.constant 0 : i32
    return %c0_i32, %c0_i32_0 : i32, i32
  }
  func.func @transform_4(%arg0: i32) -> (i32, i32) {
    %c0_i32 = arith.constant 0 : i32
    %c0_i32_0 = arith.constant 0 : i32
    %c0_i32_1 = arith.constant 0 : i32
    return %c0_i32, %c0_i32_0 : i32, i32
  }
  func.func @transform_5(%arg0: i32) -> (i32, i32) {
    %c0_i32 = arith.constant 0 : i32
    %c0_i32_0 = arith.constant 0 : i32
    %c0_i32_1 = arith.constant 0 : i32
    return %c0_i32, %c0_i32_0 : i32, i32
  }
  func.func @transform_6(%arg0: i32) -> (i32, i32) {
    %c0_i32 = arith.constant 0 : i32
    %c0_i32_0 = arith.constant 0 : i32
    %c0_i32_1 = arith.constant 0 : i32
    return %c0_i32, %c0_i32_0 : i32, i32
  }
  func.func @transform_7(%arg0: i32) -> (i32, i32) {
    %c0_i32 = arith.constant 0 : i32
    %c0_i32_0 = arith.constant 0 : i32
    %c0_i32_1 = arith.constant 0 : i32
    return %c0_i32, %c0_i32_0 : i32, i32
  }
  func.func @transform_8(%arg0: i32) -> (i32, i32) {
    %c0_i32 = arith.constant 0 : i32
    %c0_i32_0 = arith.constant 0 : i32
    %c0_i32_1 = arith.constant 0 : i32
    return %c0_i32, %c0_i32_0 : i32, i32
  }
  func.func @transform_9(%arg0: i32) -> (i32, i32) {
    %c0_i32 = arith.constant 0 : i32
    %c0_i32_0 = arith.constant 0 : i32
    %c0_i32_1 = arith.constant 0 : i32
    return %c0_i32, %c0_i32_0 : i32, i32
  }
  func.func @transform_10(%arg0: i32) -> (i32, i32) {
    %c0_i32 = arith.constant 0 : i32
    %c0_i32_0 = arith.constant 0 : i32
    %c0_i32_1 = arith.constant 0 : i32
    return %c0_i32, %c0_i32_0 : i32, i32
  }
  func.func @transform_11(%arg0: i32) -> (i32, i32) {
    %c0_i32 = arith.constant 0 : i32
    %c0_i32_0 = arith.constant 0 : i32
    %c0_i32_1 = arith.constant 0 : i32
    return %c0_i32, %c0_i32_0 : i32, i32
  }
}

</mosaic_0001>

<llo_original>
// kernel: tpu_custom_call.1
$region0: #{tpu_custom_call.1}
  #allocation0 [shape = 'u32[]', space=smem, size = 0x4, offset = 0x4, fixed_abs, tag = 'smem constant byte address 0x4 - core index']
  #allocation1 [shape = 'u32[144,128]{1,0:T(1,128)}', space=vmem, size = 0x12000, scoped, tag = 'internal scratch']
  #allocation2 [shape = 'f32[64,128]{1,0:T(8,128)}', space=vmem, size = 0x8000, scoped, tag = 'scratch operand']
  %s0 = inlined_call_operand.vmem [shape: s32[64,1], index: 0, kind: input, shape index: {}]
  %s1 = inlined_call_operand.vmem [shape: f32[8,128], index: 1, kind: input, shape index: {}]
  %s2 = inlined_call_operand.hbm [shape: f32[128,128], index: 2, kind: input, shape index: {}]
  %s3 = inlined_call_operand.vmem [shape: f32[1,128], index: 3, kind: input, shape index: {}]
  %s4 = inlined_call_operand.hbm [shape: f32[32,384], index: 4, kind: input, shape index: {}]
  %s5 = inlined_call_operand.vmem [shape: f32[1,384], index: 5, kind: input, shape index: {}]
  %s6 = inlined_call_operand.vmem [shape: f32[1,128], index: 6, kind: input, shape index: {}]
  %s7 = inlined_call_operand.hbm [shape: f32[128,384], index: 7, kind: input, shape index: {}]
  %s8 = inlined_call_operand.hbm [shape: f32[128,128], index: 8, kind: input, shape index: {}]
  %s9 = inlined_call_operand.vmem [shape: f32[1,128], index: 9, kind: input, shape index: {}]
  %s10 = inlined_call_operand.hbm [shape: f32[64,128], index: 10, kind: output, shape index: {0}]
  %s11 = inlined_call_operand.hbm [shape: f32[8,128], index: 11, kind: output, shape index: {1}]
  %12 = xla_tuple %s10, %s11
  %s13 = sld [smem:[#allocation0]]
  $region74: #{tpu_custom_call.1} parent=0
    _
  %s15 = ssub.s32 1, %s13
  %s16 = scalar_select 0, %s15, %s13
  $region1: #{tpu_custom_call.1} parent=0
    #allocation3 [shape = 'u8[65536]{0}', space=vmem, size = 0x10000, scoped, tag = 'input window, operand 2, single buffered']
    #allocation4 [shape = 's32[1]{0}', space=sflag, size = 0x4, scoped, tag = 'scoped memory for tpu_custom_call.1']
    #allocation5 [shape = 's32[1]{0}', space=sflag, size = 0x4, scoped, tag = 'scoped memory for tpu_custom_call.1']
    #allocation6 [shape = 'u8[49152]{0}', space=vmem, size = 0xc000, scoped, tag = 'input window, operand 4, single buffered']
    #allocation7 [shape = 's32[1]{0}', space=sflag, size = 0x4, scoped, tag = 'scoped memory for tpu_custom_call.1']
    #allocation8 [shape = 'u8[196608]{0}', space=vmem, size = 0x30000, scoped, tag = 'input window, operand 7, single buffered']
    #allocation9 [shape = 'u8[65536]{0}', space=vmem, size = 0x10000, scoped, tag = 'input window, operand 8, single buffered']
    #allocation10 [shape = 's32[1]{0}', space=sflag, size = 0x4, scoped, tag = 'scoped memory for tpu_custom_call.1']
    #allocation11 [shape = 'u8[32768]{0}', space=vmem, size = 0x8000, scoped, tag = 'output window, operand 0, single buffered']
    #allocation12 [shape = 'u8[4096]{0}', space=vmem, size = 0x1000, scoped, tag = 'output window, operand 1, single buffered']
    #allocation13 [shape = 's32[1]{0}', space=sflag, size = 0x4, scoped, tag = 'scoped memory for tpu_custom_call.1']
    %17 = vsyncpa [#allocation4], 0
    %18 = vsyncpa [#allocation7], 0
    %19 = vsyncpa [#allocation10], 0
    %20 = vsyncpa [#allocation5], 0
    %21 = vsyncpa [#allocation13], 0
    // Predicated region
    $region2: #{tpu_custom_call.1} parent=1 // pred_check
      _
    $region3: #{tpu_custom_call.1} parent=1 // pred_check_branch
      %23 = sbr.rel (0) target = $region5
    $region4: #{tpu_custom_call.1} parent=1 // pred_region
      _
    $region5: #{tpu_custom_call.1} parent=1 // pred_fallthru
      _
    // Predicated region
    $region6: #{tpu_custom_call.1} parent=1 // pred_check
      _
    $region7: #{tpu_custom_call.1} parent=1 // pred_check_branch
      %25 = sbr.rel (0) target = $region9
    $region8: #{tpu_custom_call.1} parent=1 // pred_region
      _
    $region9: #{tpu_custom_call.1} parent=1 // pred_fallthru
      _
    // Predicated region
    $region10: #{tpu_custom_call.1} parent=1 // pred_check
      _
    $region11: #{tpu_custom_call.1} parent=1 // pred_check_branch
      %27 = sbr.rel (0) target = $region13
    $region12: #{tpu_custom_call.1} parent=1 // pred_region
      %s29 = ssub.s32 2048, 2048
      %30 = vsyncadd [#allocation4], %s29
      %s31 = sshll.u32 [#allocation3], 4
      %s32 = int_to_ptr.vmem [resolvable:$true] %s31
      %37 = dma.hbm_to_vmem [thread:$0]  %s2, 2048, %s32, [#allocation4], 128, 128, 8
    $region13: #{tpu_custom_call.1} parent=1 // pred_fallthru
      _
    // Predicated region
    $region14: #{tpu_custom_call.1} parent=1 // pred_check
      _
    $region15: #{tpu_custom_call.1} parent=1 // pred_check_branch
      %39 = sbr.rel (0) target = $region17
    $region16: #{tpu_custom_call.1} parent=1 // pred_region
      _
    $region17: #{tpu_custom_call.1} parent=1 // pred_fallthru
      _
    // Predicated region
    $region18: #{tpu_custom_call.1} parent=1 // pred_check
      _
    $region19: #{tpu_custom_call.1} parent=1 // pred_check_branch
      %41 = sbr.rel (0) target = $region21
    $region20: #{tpu_custom_call.1} parent=1 // pred_region
      %s43 = ssub.s32 1536, 1536
      %44 = vsyncadd [#allocation7], %s43
      %s45 = sshll.u32 [#allocation6], 4
      %s46 = int_to_ptr.vmem [resolvable:$true] %s45
      %51 = dma.hbm_to_vmem [thread:$0]  %s4, 1536, %s46, [#allocation7], 384, 384, 24
    $region21: #{tpu_custom_call.1} parent=1 // pred_fallthru
      _
    // Predicated region
    $region22: #{tpu_custom_call.1} parent=1 // pred_check
      _
    $region23: #{tpu_custom_call.1} parent=1 // pred_check_branch
      %53 = sbr.rel (0) target = $region25
    $region24: #{tpu_custom_call.1} parent=1 // pred_region
      _
    $region25: #{tpu_custom_call.1} parent=1 // pred_fallthru
      _
    // Predicated region
    $region26: #{tpu_custom_call.1} parent=1 // pred_check
      _
    $region27: #{tpu_custom_call.1} parent=1 // pred_check_branch
      %55 = sbr.rel (0) target = $region29
    $region28: #{tpu_custom_call.1} parent=1 // pred_region
      _
    $region29: #{tpu_custom_call.1} parent=1 // pred_fallthru
      _
    // Predicated region
    $region30: #{tpu_custom_call.1} parent=1 // pred_check
      _
    $region31: #{tpu_custom_call.1} parent=1 // pred_check_branch
      %57 = sbr.rel (0) target = $region33
    $region32: #{tpu_custom_call.1} parent=1 // pred_region
      %s59 = ssub.s32 6144, 6144
      %60 = vsyncadd [#allocation7], %s59
      %s61 = sshll.u32 [#allocation8], 4
      %s62 = int_to_ptr.vmem [resolvable:$true] %s61
      %67 = dma.hbm_to_vmem [thread:$0]  %s7, 6144, %s62, [#allocation7], 384, 384, 24
    $region33: #{tpu_custom_call.1} parent=1 // pred_fallthru
      _
    // Predicated region
    $region34: #{tpu_custom_call.1} parent=1 // pred_check
      _
    $region35: #{tpu_custom_call.1} parent=1 // pred_check_branch
      %69 = sbr.rel (0) target = $region37
    $region36: #{tpu_custom_call.1} parent=1 // pred_region
      %s71 = ssub.s32 2048, 2048
      %72 = vsyncadd [#allocation10], %s71
      %s73 = sshll.u32 [#allocation9], 4
      %s74 = int_to_ptr.vmem [resolvable:$true] %s73
      %79 = dma.hbm_to_vmem [thread:$0]  %s8, 2048, %s74, [#allocation10], 128, 128, 8
    $region37: #{tpu_custom_call.1} parent=1 // pred_fallthru
      _
    // Predicated region
    $region38: #{tpu_custom_call.1} parent=1 // pred_check
      _
    $region39: #{tpu_custom_call.1} parent=1 // pred_check_branch
      %81 = sbr.rel (0) target = $region41
    $region40: #{tpu_custom_call.1} parent=1 // pred_region
      _
    $region41: #{tpu_custom_call.1} parent=1 // pred_fallthru
      _
    // Predicated region
    $region42: #{tpu_custom_call.1} parent=1 // pred_check
      _
    $region43: #{tpu_custom_call.1} parent=1 // pred_check_branch
      %83 = sbr.rel (0) target = $region45
    $region44: #{tpu_custom_call.1} parent=1 // pred_region
      %84 = dma.done [#allocation4], 2048
    $region45: #{tpu_custom_call.1} parent=1 // pred_fallthru
      _
    // Predicated region
    $region46: #{tpu_custom_call.1} parent=1 // pred_check
      _
    $region47: #{tpu_custom_call.1} parent=1 // pred_check_branch
      %86 = sbr.rel (0) target = $region49
    $region48: #{tpu_custom_call.1} parent=1 // pred_region
      %87 = dma.done [#allocation7], 1536
    $region49: #{tpu_custom_call.1} parent=1 // pred_fallthru
      _
    // Predicated region
    $region50: #{tpu_custom_call.1} parent=1 // pred_check
      _
    $region51: #{tpu_custom_call.1} parent=1 // pred_check_branch
      %89 = sbr.rel (0) target = $region53
    $region52: #{tpu_custom_call.1} parent=1 // pred_region
      %90 = dma.done [#allocation7], 6144
    $region53: #{tpu_custom_call.1} parent=1 // pred_fallthru
      _
    // Predicated region
    $region54: #{tpu_custom_call.1} parent=1 // pred_check
      _
    $region55: #{tpu_custom_call.1} parent=1 // pred_check_branch
      %92 = sbr.rel (0) target = $region57
    $region56: #{tpu_custom_call.1} parent=1 // pred_region
      %93 = dma.done [#allocation10], 2048
    $region57: #{tpu_custom_call.1} parent=1 // pred_fallthru
      _
    %v94 = vld [vmem:[%s1] sm:$0xff]
    %v95 = vld [vmem:[#allocation3] sm:$0xff]
    %v96 = vld [vmem:[#allocation3 + $0x8] sm:$0xff]
    %v97 = vld [vmem:[#allocation3 + $0x10] sm:$0xff]
    %v98 = vld [vmem:[#allocation3 + $0x18] sm:$0xff]
    %v99 = vld [vmem:[#allocation3 + $0x20] sm:$0xff]
    %v100 = vld [vmem:[#allocation3 + $0x28] sm:$0xff]
    %v101 = vld [vmem:[#allocation3 + $0x30] sm:$0xff]
    %v102 = vld [vmem:[#allocation3 + $0x38] sm:$0xff]
    %v103 = vld [vmem:[#allocation3 + $0x40] sm:$0xff]
    %v104 = vld [vmem:[#allocation3 + $0x48] sm:$0xff]
    %v105 = vld [vmem:[#allocation3 + $0x50] sm:$0xff]
    %v106 = vld [vmem:[#allocation3 + $0x58] sm:$0xff]
    %v107 = vld [vmem:[#allocation3 + $0x60] sm:$0xff]
    %v108 = vld [vmem:[#allocation3 + $0x68] sm:$0xff]
    %v109 = vld [vmem:[#allocation3 + $0x70] sm:$0xff]
    %v110 = vld [vmem:[#allocation3 + $0x78] sm:$0xff]
    %v111 = vld [vmem:[%s3] sm:$0x1]
    %v113 = vlaneseq
    %v114 = vshrl.u32 %v113, 7
    %v115 = vsub.s32 0, %v114
    %v116 = vrot.slane %v111, %v115
    %118 = vmatprep.subr.mxu0 0.0
    %119 = vmatpush1.msra.mxu0 %v110
    %120 = vmatprep.subr.mxu0 0.0
    %121 = vmatpush1.msra.mxu0 %v109
    %122 = vmatprep.subr.mxu0 0.0
    %123 = vmatpush1.msra.mxu0 %v108
    %124 = vmatprep.subr.mxu0 0.0
    %125 = vmatpush1.msra.mxu0 %v107
    %126 = vmatprep.subr.mxu0 0.0
    %127 = vmatpush1.msra.mxu0 %v106
    %128 = vmatprep.subr.mxu0 0.0
    %129 = vmatpush1.msra.mxu0 %v105
    %130 = vmatprep.subr.mxu0 0.0
    %131 = vmatpush1.msra.mxu0 %v104
    %132 = vmatprep.subr.mxu0 0.0
    %133 = vmatpush1.msra.mxu0 %v103
    %134 = vmatprep.subr.mxu0 0.0
    %135 = vmatpush1.msra.mxu0 %v102
    %136 = vmatprep.subr.mxu0 0.0
    %137 = vmatpush1.msra.mxu0 %v101
    %138 = vmatprep.subr.mxu0 0.0
    %139 = vmatpush1.msra.mxu0 %v100
    %140 = vmatprep.subr.mxu0 0.0
    %141 = vmatpush1.msra.mxu0 %v99
    %142 = vmatprep.subr.mxu0 0.0
    %143 = vmatpush1.msra.mxu0 %v98
    %144 = vmatprep.subr.mxu0 0.0
    %145 = vmatpush1.msra.mxu0 %v97
    %146 = vmatprep.subr.mxu0 0.0
    %147 = vmatpush1.msra.mxu0 %v96
    %148 = vmatprep.subr.mxu0 0.0
    %149 = vmatpush1.msra.mxu0 %v95
    %150 = vmatprep.subr.mxu0 0.0
    %151 = vmatpush2.msra.mxu0 0.0
    %152 = vmatprep.subr.mxu0 0.0
    %153 = vmatpush2.msra.mxu0 0.0
    %154 = vmatprep.subr.mxu0 0.0
    %155 = vmatpush2.msra.mxu0 0.0
    %156 = vmatprep.subr.mxu0 0.0
    %157 = vmatpush2.msra.mxu0 0.0
    %158 = vmatprep.subr.mxu0 0.0
    %159 = vmatpush2.msra.mxu0 0.0
    %160 = vmatprep.subr.mxu0 0.0
    %161 = vmatpush2.msra.mxu0 0.0
    %162 = vmatprep.subr.mxu0 0.0
    %163 = vmatpush2.msra.mxu0 0.0
    %164 = vmatprep.subr.mxu0 0.0
    %165 = vmatpush2.msra.mxu0 0.0
    %166 = vmatprep.subr.mxu0 0.0
    %167 = vmatpush2.msra.mxu0 0.0
    %168 = vmatprep.subr.mxu0 0.0
    %169 = vmatpush2.msra.mxu0 0.0
    %170 = vmatprep.subr.mxu0 0.0
    %171 = vmatpush2.msra.mxu0 0.0
    %172 = vmatprep.subr.mxu0 0.0
    %173 = vmatpush2.msra.mxu0 0.0
    %174 = vmatprep.subr.mxu0 0.0
    %175 = vmatpush2.msra.mxu0 0.0
    %176 = vmatprep.subr.mxu0 0.0
    %177 = vmatpush2.msra.mxu0 0.0
    %178 = vmatprep.subr.mxu0 0.0
    %179 = vmatpush2.msra.mxu0 0.0
    %180 = vmatprep.subr.mxu0 0.0
    %181 = vmatpush2.msra.mxu0 0.0
    %182 = vmatprep.mubr.f32.mxu0 0.0
    %183 = vmatmul.mubr.f32.gmra.mxu0 %v94
    %v184 = vpop.f32.mrf.mxu0
    %v185 = vadd.f32 %v116, %v184
    %v186 = vpop.f32.mrf.mxu0
    %187 = vdwg.mxu0
    %v188 = vmax.f32 %v185, 0.0
    %v189 = vld [vmem:[%s0] sm:$0xff]
    %v190 = vld [vmem:[%s0 + $0x8] sm:$0xff]
    %v191 = vld [vmem:[%s0 + $0x10] sm:$0xff]
    %v192 = vld [vmem:[%s0 + $0x18] sm:$0xff]
    %v193 = vld [vmem:[%s0 + $0x20] sm:$0xff]
    %v194 = vld [vmem:[%s0 + $0x28] sm:$0xff]
    %v195 = vld [vmem:[%s0 + $0x30] sm:$0xff]
    %v196 = vld [vmem:[%s0 + $0x38] sm:$0xff]
    %v197 = vlaneseq
    %v198 = vand.u32 %v197, 127
    %199 = vset.pattern.permute.xlu0 0
    %200 = vperm.xlu0 %199, %v189
    %v201 = vpop.permute.xlu0 %200
    %202 = vset.pattern.permute.xlu0 0
    %203 = vperm.xlu0 %202, %v190
    %v204 = vpop.permute.xlu0 %203
    %205 = vset.pattern.permute.xlu0 0
    %206 = vperm.xlu0 %205, %v191
    %v207 = vpop.permute.xlu0 %206
    %208 = vset.pattern.permute.xlu0 0
    %209 = vperm.xlu0 %208, %v192
    %v210 = vpop.permute.xlu0 %209
    %211 = vset.pattern.permute.xlu0 0
    %212 = vperm.xlu0 %211, %v193
    %v213 = vpop.permute.xlu0 %212
    %214 = vset.pattern.permute.xlu0 0
    %215 = vperm.xlu0 %214, %v194
    %v216 = vpop.permute.xlu0 %215
    %217 = vset.pattern.permute.xlu0 0
    %218 = vperm.xlu0 %217, %v195
    %v219 = vpop.permute.xlu0 %218
    %220 = vset.pattern.permute.xlu0 0
    %221 = vperm.xlu0 %220, %v196
    %v222 = vpop.permute.xlu0 %221
    %vm223 = vcmp.eq.s32.totalorder %v201, %v198
    %vm224 = vcmp.eq.s32.totalorder %v204, %v198
    %vm225 = vcmp.eq.s32.totalorder %v207, %v198
    %vm226 = vcmp.eq.s32.totalorder %v210, %v198
    %vm227 = vcmp.eq.s32.totalorder %v213, %v198
    %vm228 = vcmp.eq.s32.totalorder %v216, %v198
    %vm229 = vcmp.eq.s32.totalorder %v219, %v198
    %vm230 = vcmp.eq.s32.totalorder %v222, %v198
    %v231 = vsel %vm223, 1, 0
    %v232 = vsel %vm224, 1, 0
    %v233 = vsel %vm225, 1, 0
    %v234 = vsel %vm226, 1, 0
    %v235 = vsel %vm227, 1, 0
    %v236 = vsel %vm228, 1, 0
    %v237 = vsel %vm229, 1, 0
    %v238 = vsel %vm230, 1, 0
    %v239 = vcvt.s32.f32 %v231
    %v240 = vcvt.s32.f32 %v232
    %v241 = vcvt.s32.f32 %v233
    %v242 = vcvt.s32.f32 %v234
    %v243 = vcvt.s32.f32 %v235
    %v244 = vcvt.s32.f32 %v236
    %v245 = vcvt.s32.f32 %v237
    %v246 = vcvt.s32.f32 %v238
    %v247 = vld [vmem:[#allocation6] sm:$0xff]
    %v248 = vld [vmem:[#allocation6 + $0x8] sm:$0xff]
    %v249 = vld [vmem:[#allocation6 + $0x10] sm:$0xff]
    %v250 = vld [vmem:[#allocation6 + $0x18] sm:$0xff]
    %v251 = vld [vmem:[#allocation6 + $0x20] sm:$0xff]
    %v252 = vld [vmem:[#allocation6 + $0x28] sm:$0xff]
    %v253 = vld [vmem:[#allocation6 + $0x30] sm:$0xff]
    %v254 = vld [vmem:[#allocation6 + $0x38] sm:$0xff]
    %v255 = vld [vmem:[#allocation6 + $0x40] sm:$0xff]
    %v256 = vld [vmem:[#allocation6 + $0x48] sm:$0xff]
    %v257 = vld [vmem:[#allocation6 + $0x50] sm:$0xff]
    %v258 = vld [vmem:[#allocation6 + $0x58] sm:$0xff]
    %v259 = vld [vmem:[%s5] sm:$0x7]
    %v261 = vlaneseq
    %v262 = vshrl.u32 %v261, 7
    %v263 = vsub.s32 0, %v262
    %v264 = vrot.slane %v259, %v263
    %v265 = vlaneseq
    %v266 = vshrl.u32 %v265, 7
    %v267 = vsub.s32 1, %v266
    %v268 = vrot.slane %v259, %v267
    %v269 = vlaneseq
    %v270 = vshrl.u32 %v269, 7
    %v271 = vsub.s32 2, %v270
    %v272 = vrot.slane %v259, %v271
    %vm276 = vcmask 261120
    %v278 = vsel %vm276, %v239, 0
    %v281 = vsel %vm276, %v240, 0
    %v284 = vsel %vm276, %v241, 0
    %v287 = vsel %vm276, %v242, 0
    %v290 = vsel %vm276, %v243, 0
    %v293 = vsel %vm276, %v244, 0
    %v296 = vsel %vm276, %v245, 0
    %v299 = vsel %vm276, %v246, 0
    %301 = vmatprep.subr.mxu0 0.0
    %302 = vmatpush1.msra.mxu0 0.0
    %303 = vmatprep.subr.mxu0 0.0
    %304 = vmatpush1.msra.mxu0 0.0
    %305 = vmatprep.subr.mxu0 0.0
    %306 = vmatpush1.msra.mxu0 0.0
    %307 = vmatprep.subr.mxu0 0.0
    %308 = vmatpush1.msra.mxu0 0.0
    %309 = vmatprep.subr.mxu0 0.0
    %310 = vmatpush1.msra.mxu0 0.0
    %311 = vmatprep.subr.mxu0 0.0
    %312 = vmatpush1.msra.mxu0 0.0
    %313 = vmatprep.subr.mxu0 0.0
    %314 = vmatpush1.msra.mxu0 0.0
    %315 = vmatprep.subr.mxu0 0.0
    %316 = vmatpush1.msra.mxu0 0.0
    %317 = vmatprep.subr.mxu0 0.0
    %318 = vmatpush1.msra.mxu0 0.0
    %319 = vmatprep.subr.mxu0 0.0
    %320 = vmatpush1.msra.mxu0 0.0
    %321 = vmatprep.subr.mxu0 0.0
    %322 = vmatpush1.msra.mxu0 0.0
    %323 = vmatprep.subr.mxu0 0.0
    %324 = vmatpush1.msra.mxu0 0.0
    %325 = vmatprep.subr.mxu0 %v257
    %326 = vmatpush1.msra.mxu0 %v256
    %327 = vmatprep.subr.mxu0 %v254
    %328 = vmatpush1.msra.mxu0 %v253
    %329 = vmatprep.subr.mxu0 %v251
    %330 = vmatpush1.msra.mxu0 %v250
    %331 = vmatprep.subr.mxu0 %v248
    %332 = vmatpush1.msra.mxu0 %v247
    %333 = vmatprep.subr.mxu0 0.0
    %334 = vmatpush2.msra.mxu0 0.0
    %335 = vmatprep.subr.mxu0 0.0
    %336 = vmatpush2.msra.mxu0 0.0
    %337 = vmatprep.subr.mxu0 0.0
    %338 = vmatpush2.msra.mxu0 0.0
    %339 = vmatprep.subr.mxu0 0.0
    %340 = vmatpush2.msra.mxu0 0.0
    %341 = vmatprep.subr.mxu0 0.0
    %342 = vmatpush2.msra.mxu0 0.0
    %343 = vmatprep.subr.mxu0 0.0
    %344 = vmatpush2.msra.mxu0 0.0
    %345 = vmatprep.subr.mxu0 0.0
    %346 = vmatpush2.msra.mxu0 0.0
    %347 = vmatprep.subr.mxu0 0.0
    %348 = vmatpush2.msra.mxu0 0.0
    %349 = vmatprep.subr.mxu0 0.0
    %350 = vmatpush2.msra.mxu0 0.0
    %351 = vmatprep.subr.mxu0 0.0
    %352 = vmatpush2.msra.mxu0 0.0
    %353 = vmatprep.subr.mxu0 0.0
    %354 = vmatpush2.msra.mxu0 0.0
    %355 = vmatprep.subr.mxu0 0.0
    %356 = vmatpush2.msra.mxu0 0.0
    %357 = vmatprep.subr.mxu0 0.0
    %358 = vmatpush2.msra.mxu0 0.0
    %359 = vmatprep.subr.mxu0 0.0
    %360 = vmatpush2.msra.mxu0 0.0
    %361 = vmatprep.subr.mxu0 0.0
    %362 = vmatpush2.msra.mxu0 0.0
    %363 = vmatprep.subr.mxu0 0.0
    %364 = vmatpush2.msra.mxu0 0.0
    %365 = vmatprep.mubr.f32.mxu0 0.0
    %366 = vmatmul.mubr.f32.gmra.mxu0 %v278
    %v367 = vpop.f32.mrf.mxu0
    %v368 = vadd.f32 %v264, %v367
    %v369 = vpop.f32.mrf.mxu0
    %v370 = vadd.f32 %v268, %v369
    %371 = vmatprep.mubr.f32.mxu0 0.0
    %372 = vmatmul.mubr.f32.gmra.mxu0 %v281
    %v373 = vpop.f32.mrf.mxu0
    %v374 = vadd.f32 %v264, %v373
    %v375 = vpop.f32.mrf.mxu0
    %v376 = vadd.f32 %v268, %v375
    %377 = vmatprep.mubr.f32.mxu0 0.0
    %378 = vmatmul.mubr.f32.gmra.mxu0 %v284
    %v379 = vpop.f32.mrf.mxu0
    %v380 = vadd.f32 %v264, %v379
    %v381 = vpop.f32.mrf.mxu0
    %v382 = vadd.f32 %v268, %v381
    %383 = vmatprep.mubr.f32.mxu0 0.0
    %384 = vmatmul.mubr.f32.gmra.mxu0 %v287
    %v385 = vpop.f32.mrf.mxu0
    %v386 = vadd.f32 %v264, %v385
    %v387 = vpop.f32.mrf.mxu0
    %v388 = vadd.f32 %v268, %v387
    %389 = vmatprep.mubr.f32.mxu0 0.0
    %390 = vmatmul.mubr.f32.gmra.mxu0 %v290
    %v391 = vpop.f32.mrf.mxu0
    %v392 = vadd.f32 %v264, %v391
    %v393 = vpop.f32.mrf.mxu0
    %v394 = vadd.f32 %v268, %v393
    %395 = vmatprep.mubr.f32.mxu0 0.0
    %396 = vmatmul.mubr.f32.gmra.mxu0 %v293
    %v397 = vpop.f32.mrf.mxu0
    %v398 = vadd.f32 %v264, %v397
    %v399 = vpop.f32.mrf.mxu0
    %v400 = vadd.f32 %v268, %v399
    %401 = vmatprep.mubr.f32.mxu0 0.0
    %402 = vmatmul.mubr.f32.gmra.mxu0 %v296
    %v403 = vpop.f32.mrf.mxu0
    %v404 = vadd.f32 %v264, %v403
    %v405 = vpop.f32.mrf.mxu0
    %v406 = vadd.f32 %v268, %v405
    %407 = vmatprep.mubr.f32.mxu0 0.0
    %408 = vmatmul.mubr.f32.gmra.mxu0 %v299
    %v409 = vpop.f32.mrf.mxu0
    %v410 = vadd.f32 %v264, %v409
    %v411 = vpop.f32.mrf.mxu0
    %v412 = vadd.f32 %v268, %v411
    %413 = vdwg.mxu0
    %414 = vmatprep.subr.mxu0 0.0
    %415 = vmatpush1.msra.mxu0 0.0
    %416 = vmatprep.subr.mxu0 0.0
    %417 = vmatpush1.msra.mxu0 0.0
    %418 = vmatprep.subr.mxu0 0.0
    %419 = vmatpush1.msra.mxu0 0.0
    %420 = vmatprep.subr.mxu0 0.0
    %421 = vmatpush1.msra.mxu0 0.0
    %422 = vmatprep.subr.mxu0 0.0
    %423 = vmatpush1.msra.mxu0 0.0
    %424 = vmatprep.subr.mxu0 0.0
    %425 = vmatpush1.msra.mxu0 0.0
    %426 = vmatprep.subr.mxu0 0.0
    %427 = vmatpush1.msra.mxu0 0.0
    %428 = vmatprep.subr.mxu0 0.0
    %429 = vmatpush1.msra.mxu0 0.0
    %430 = vmatprep.subr.mxu0 0.0
    %431 = vmatpush1.msra.mxu0 0.0
    %432 = vmatprep.subr.mxu0 0.0
    %433 = vmatpush1.msra.mxu0 0.0
    %434 = vmatprep.subr.mxu0 0.0
    %435 = vmatpush1.msra.mxu0 0.0
    %436 = vmatprep.subr.mxu0 0.0
    %437 = vmatpush1.msra.mxu0 0.0
    %438 = vmatprep.subr.mxu0 0.0
    %439 = vmatpush1.msra.mxu0 %v258
    %440 = vmatprep.subr.mxu0 0.0
    %441 = vmatpush1.msra.mxu0 %v255
    %442 = vmatprep.subr.mxu0 0.0
    %443 = vmatpush1.msra.mxu0 %v252
    %444 = vmatprep.subr.mxu0 0.0
    %445 = vmatpush1.msra.mxu0 %v249
    %446 = vmatprep.subr.mxu0 0.0
    %447 = vmatpush2.msra.mxu0 0.0
    %448 = vmatprep.subr.mxu0 0.0
    %449 = vmatpush2.msra.mxu0 0.0
    %450 = vmatprep.subr.mxu0 0.0
    %451 = vmatpush2.msra.mxu0 0.0
    %452 = vmatprep.subr.mxu0 0.0
    %453 = vmatpush2.msra.mxu0 0.0
    %454 = vmatprep.subr.mxu0 0.0
    %455 = vmatpush2.msra.mxu0 0.0
    %456 = vmatprep.subr.mxu0 0.0
    %457 = vmatpush2.msra.mxu0 0.0
    %458 = vmatprep.subr.mxu0 0.0
    %459 = vmatpush2.msra.mxu0 0.0
    %460 = vmatprep.subr.mxu0 0.0
    %461 = vmatpush2.msra.mxu0 0.0
    %462 = vmatprep.subr.mxu0 0.0
    %463 = vmatpush2.msra.mxu0 0.0
    %464 = vmatprep.subr.mxu0 0.0
    %465 = vmatpush2.msra.mxu0 0.0
    %466 = vmatprep.subr.mxu0 0.0
    %467 = vmatpush2.msra.mxu0 0.0
    %468 = vmatprep.subr.mxu0 0.0
    %469 = vmatpush2.msra.mxu0 0.0
    %470 = vmatprep.subr.mxu0 0.0
    %471 = vmatpush2.msra.mxu0 0.0
    %472 = vmatprep.subr.mxu0 0.0
    %473 = vmatpush2.msra.mxu0 0.0
    %474 = vmatprep.subr.mxu0 0.0
    %475 = vmatpush2.msra.mxu0 0.0
    %476 = vmatprep.subr.mxu0 0.0
    %477 = vmatpush2.msra.mxu0 0.0
    %478 = vmatprep.mubr.f32.mxu0 0.0
    %479 = vmatmul.mubr.f32.gmra.mxu0 %v278
    %v480 = vpop.f32.mrf.mxu0
    %v481 = vadd.f32 %v272, %v480
    %v482 = vpop.f32.mrf.mxu0
    %483 = vmatprep.mubr.f32.mxu0 0.0
    %484 = vmatmul.mubr.f32.gmra.mxu0 %v281
    %v485 = vpop.f32.mrf.mxu0
    %v486 = vadd.f32 %v272, %v485
    %v487 = vpop.f32.mrf.mxu0
    %488 = vmatprep.mubr.f32.mxu0 0.0
    %489 = vmatmul.mubr.f32.gmra.mxu0 %v284
    %v490 = vpop.f32.mrf.mxu0
    %v491 = vadd.f32 %v272, %v490
    %v492 = vpop.f32.mrf.mxu0
    %493 = vmatprep.mubr.f32.mxu0 0.0
    %494 = vmatmul.mubr.f32.gmra.mxu0 %v287
    %v495 = vpop.f32.mrf.mxu0
    %v496 = vadd.f32 %v272, %v495
    %v497 = vpop.f32.mrf.mxu0
    %498 = vmatprep.mubr.f32.mxu0 0.0
    %499 = vmatmul.mubr.f32.gmra.mxu0 %v290
    %v500 = vpop.f32.mrf.mxu0
    %v501 = vadd.f32 %v272, %v500
    %v502 = vpop.f32.mrf.mxu0
    %503 = vmatprep.mubr.f32.mxu0 0.0
    %504 = vmatmul.mubr.f32.gmra.mxu0 %v293
    %v505 = vpop.f32.mrf.mxu0
    %v506 = vadd.f32 %v272, %v505
    %v507 = vpop.f32.mrf.mxu0
    %508 = vmatprep.mubr.f32.mxu0 0.0
    %509 = vmatmul.mubr.f32.gmra.mxu0 %v296
    %v510 = vpop.f32.mrf.mxu0
    %v511 = vadd.f32 %v272, %v510
    %v512 = vpop.f32.mrf.mxu0
    %513 = vmatprep.mubr.f32.mxu0 0.0
    %514 = vmatmul.mubr.f32.gmra.mxu0 %v299
    %v515 = vpop.f32.mrf.mxu0
    %v516 = vadd.f32 %v272, %v515
    %v517 = vpop.f32.mrf.mxu0
    %518 = vdwg.mxu0
    %v519 = vld [vmem:[#allocation8] sm:$0xff]
    %v520 = vld [vmem:[#allocation8 + $0x8] sm:$0xff]
    %v521 = vld [vmem:[#allocation8 + $0x10] sm:$0xff]
    %v522 = vld [vmem:[#allocation8 + $0x18] sm:$0xff]
    %v523 = vld [vmem:[#allocation8 + $0x20] sm:$0xff]
    %v524 = vld [vmem:[#allocation8 + $0x28] sm:$0xff]
    %v525 = vld [vmem:[#allocation8 + $0x30] sm:$0xff]
    %v526 = vld [vmem:[#allocation8 + $0x38] sm:$0xff]
    %v527 = vld [vmem:[#allocation8 + $0x40] sm:$0xff]
    %v528 = vld [vmem:[#allocation8 + $0x48] sm:$0xff]
    %v529 = vld [vmem:[#allocation8 + $0x50] sm:$0xff]
    %v530 = vld [vmem:[#allocation8 + $0x58] sm:$0xff]
    %v531 = vld [vmem:[#allocation8 + $0x60] sm:$0xff]
    %v532 = vld [vmem:[#allocation8 + $0x68] sm:$0xff]
    %v533 = vld [vmem:[#allocation8 + $0x70] sm:$0xff]
    %v534 = vld [vmem:[#allocation8 + $0x78] sm:$0xff]
    %v535 = vld [vmem:[#allocation8 + $0x80] sm:$0xff]
    %v536 = vld [vmem:[#allocation8 + $0x88] sm:$0xff]
    %v537 = vld [vmem:[#allocation8 + $0x90] sm:$0xff]
    %v538 = vld [vmem:[#allocation8 + $0x98] sm:$0xff]
    %v539 = vld [vmem:[#allocation8 + $0xa0] sm:$0xff]
    %v540 = vld [vmem:[#allocation8 + $0xa8] sm:$0xff]
    %v541 = vld [vmem:[#allocation8 + $0xb0] sm:$0xff]
    %v542 = vld [vmem:[#allocation8 + $0xb8] sm:$0xff]
    %v543 = vld [vmem:[#allocation8 + $0xc0] sm:$0xff]
    %v544 = vld [vmem:[#allocation8 + $0xc8] sm:$0xff]
    %v545 = vld [vmem:[#allocation8 + $0xd0] sm:$0xff]
    %v546 = vld [vmem:[#allocation8 + $0xd8] sm:$0xff]
    %v547 = vld [vmem:[#allocation8 + $0xe0] sm:$0xff]
    %v548 = vld [vmem:[#allocation8 + $0xe8] sm:$0xff]
    %v549 = vld [vmem:[#allocation8 + $0xf0] sm:$0xff]
    %v550 = vld [vmem:[#allocation8 + $0xf8] sm:$0xff]
    %v551 = vld [vmem:[#allocation8 + $0x100] sm:$0xff]
    %v552 = vld [vmem:[#allocation8 + $0x108] sm:$0xff]
    %v553 = vld [vmem:[#allocation8 + $0x110] sm:$0xff]
    %v554 = vld [vmem:[#allocation8 + $0x118] sm:$0xff]
    %v555 = vld [vmem:[#allocation8 + $0x120] sm:$0xff]
    %v556 = vld [vmem:[#allocation8 + $0x128] sm:$0xff]
    %v557 = vld [vmem:[#allocation8 + $0x130] sm:$0xff]
    %v558 = vld [vmem:[#allocation8 + $0x138] sm:$0xff]
    %v559 = vld [vmem:[#allocation8 + $0x140] sm:$0xff]
    %v560 = vld [vmem:[#allocation8 + $0x148] sm:$0xff]
    %v561 = vld [vmem:[#allocation8 + $0x150] sm:$0xff]
    %v562 = vld [vmem:[#allocation8 + $0x158] sm:$0xff]
    %v563 = vld [vmem:[#allocation8 + $0x160] sm:$0xff]
    %v564 = vld [vmem:[#allocation8 + $0x168] sm:$0xff]
    %v565 = vld [vmem:[#allocation8 + $0x170] sm:$0xff]
    %v566 = vld [vmem:[#allocation8 + $0x178] sm:$0xff]
    %v567 = vld [vmem:[%s6] sm:$0x1]
    %v569 = vlaneseq
    %v570 = vshrl.u32 %v569, 7
    %v571 = vsub.s32 0, %v570
    %v572 = vrot.slane %v567, %v571
    %574 = vmatprep.subr.mxu0 %v565
    %575 = vmatpush1.msra.mxu0 %v564
    %576 = vmatprep.subr.mxu0 %v562
    %577 = vmatpush1.msra.mxu0 %v561
    %578 = vmatprep.subr.mxu0 %v559
    %579 = vmatpush1.msra.mxu0 %v558
    %580 = vmatprep.subr.mxu0 %v556
    %581 = vmatpush1.msra.mxu0 %v555
    %582 = vmatprep.subr.mxu0 %v553
    %583 = vmatpush1.msra.mxu0 %v552
    %584 = vmatprep.subr.mxu0 %v550
    %585 = vmatpush1.msra.mxu0 %v549
    %586 = vmatprep.subr.mxu0 %v547
    %587 = vmatpush1.msra.mxu0 %v546
    %588 = vmatprep.subr.mxu0 %v544
    %589 = vmatpush1.msra.mxu0 %v543
    %590 = vmatprep.subr.mxu0 %v541
    %591 = vmatpush1.msra.mxu0 %v540
    %592 = vmatprep.subr.mxu0 %v538
    %593 = vmatpush1.msra.mxu0 %v537
    %594 = vmatprep.subr.mxu0 %v535
    %595 = vmatpush1.msra.mxu0 %v534
    %596 = vmatprep.subr.mxu0 %v532
    %597 = vmatpush1.msra.mxu0 %v531
    %598 = vmatprep.subr.mxu0 %v529
    %599 = vmatpush1.msra.mxu0 %v528
    %600 = vmatprep.subr.mxu0 %v526
    %601 = vmatpush1.msra.mxu0 %v525
    %602 = vmatprep.subr.mxu0 %v523
    %603 = vmatpush1.msra.mxu0 %v522
    %604 = vmatprep.subr.mxu0 %v520
    %605 = vmatpush1.msra.mxu0 %v519
    %606 = vmatprep.subr.mxu0 0.0
    %607 = vmatpush2.msra.mxu0 0.0
    %608 = vmatprep.subr.mxu0 0.0
    %609 = vmatpush2.msra.mxu0 0.0
    %610 = vmatprep.subr.mxu0 0.0
    %611 = vmatpush2.msra.mxu0 0.0
    %612 = vmatprep.subr.mxu0 0.0
    %613 = vmatpush2.msra.mxu0 0.0
    %614 = vmatprep.subr.mxu0 0.0
    %615 = vmatpush2.msra.mxu0 0.0
    %616 = vmatprep.subr.mxu0 0.0
    %617 = vmatpush2.msra.mxu0 0.0
    %618 = vmatprep.subr.mxu0 0.0
    %619 = vmatpush2.msra.mxu0 0.0
    %620 = vmatprep.subr.mxu0 0.0
    %621 = vmatpush2.msra.mxu0 0.0
    %622 = vmatprep.subr.mxu0 0.0
    %623 = vmatpush2.msra.mxu0 0.0
    %624 = vmatprep.subr.mxu0 0.0
    %625 = vmatpush2.msra.mxu0 0.0
    %626 = vmatprep.subr.mxu0 0.0
    %627 = vmatpush2.msra.mxu0 0.0
    %628 = vmatprep.subr.mxu0 0.0
    %629 = vmatpush2.msra.mxu0 0.0
    %630 = vmatprep.subr.mxu0 0.0
    %631 = vmatpush2.msra.mxu0 0.0
    %632 = vmatprep.subr.mxu0 0.0
    %633 = vmatpush2.msra.mxu0 0.0
    %634 = vmatprep.subr.mxu0 0.0
    %635 = vmatpush2.msra.mxu0 0.0
    %636 = vmatprep.subr.mxu0 0.0
    %637 = vmatpush2.msra.mxu0 0.0
    %638 = vmatprep.mubr.f32.mxu0 0.0
    %639 = vmatmul.mubr.f32.gmra.mxu0 %v188
    %v640 = vpop.f32.mrf.mxu0
    %v641 = vadd.f32 0.0, %v640
    %v642 = vpop.f32.mrf.mxu0
    %v643 = vadd.f32 0.0, %v642
    %644 = vdwg.mxu0
    %645 = vmatprep.subr.mxu0 0.0
    %646 = vmatpush1.msra.mxu0 %v566
    %647 = vmatprep.subr.mxu0 0.0
    %648 = vmatpush1.msra.mxu0 %v563
    %649 = vmatprep.subr.mxu0 0.0
    %650 = vmatpush1.msra.mxu0 %v560
    %651 = vmatprep.subr.mxu0 0.0
    %652 = vmatpush1.msra.mxu0 %v557
    %653 = vmatprep.subr.mxu0 0.0
    %654 = vmatpush1.msra.mxu0 %v554
    %655 = vmatprep.subr.mxu0 0.0
    %656 = vmatpush1.msra.mxu0 %v551
    %657 = vmatprep.subr.mxu0 0.0
    %658 = vmatpush1.msra.mxu0 %v548
    %659 = vmatprep.subr.mxu0 0.0
    %660 = vmatpush1.msra.mxu0 %v545
    %661 = vmatprep.subr.mxu0 0.0
    %662 = vmatpush1.msra.mxu0 %v542
    %663 = vmatprep.subr.mxu0 0.0
    %664 = vmatpush1.msra.mxu0 %v539
    %665 = vmatprep.subr.mxu0 0.0
    %666 = vmatpush1.msra.mxu0 %v536
    %667 = vmatprep.subr.mxu0 0.0
    %668 = vmatpush1.msra.mxu0 %v533
    %669 = vmatprep.subr.mxu0 0.0
    %670 = vmatpush1.msra.mxu0 %v530
    %671 = vmatprep.subr.mxu0 0.0
    %672 = vmatpush1.msra.mxu0 %v527
    %673 = vmatprep.subr.mxu0 0.0
    %674 = vmatpush1.msra.mxu0 %v524
    %675 = vmatprep.subr.mxu0 0.0
    %676 = vmatpush1.msra.mxu0 %v521
    %677 = vmatprep.subr.mxu0 0.0
    %678 = vmatpush2.msra.mxu0 0.0
    %679 = vmatprep.subr.mxu0 0.0
    %680 = vmatpush2.msra.mxu0 0.0
    %681 = vmatprep.subr.mxu0 0.0
    %682 = vmatpush2.msra.mxu0 0.0
    %683 = vmatprep.subr.mxu0 0.0
    %684 = vmatpush2.msra.mxu0 0.0
    %685 = vmatprep.subr.mxu0 0.0
    %686 = vmatpush2.msra.mxu0 0.0
    %687 = vmatprep.subr.mxu0 0.0
    %688 = vmatpush2.msra.mxu0 0.0
    %689 = vmatprep.subr.mxu0 0.0
    %690 = vmatpush2.msra.mxu0 0.0
    %691 = vmatprep.subr.mxu0 0.0
    %692 = vmatpush2.msra.mxu0 0.0
    %693 = vmatprep.subr.mxu0 0.0
    %694 = vmatpush2.msra.mxu0 0.0
    %695 = vmatprep.subr.mxu0 0.0
    %696 = vmatpush2.msra.mxu0 0.0
    %697 = vmatprep.subr.mxu0 0.0
    %698 = vmatpush2.msra.mxu0 0.0
    %699 = vmatprep.subr.mxu0 0.0
    %700 = vmatpush2.msra.mxu0 0.0
    %701 = vmatprep.subr.mxu0 0.0
    %702 = vmatpush2.msra.mxu0 0.0
    %703 = vmatprep.subr.mxu0 0.0
    %704 = vmatpush2.msra.mxu0 0.0
    %705 = vmatprep.subr.mxu0 0.0
    %706 = vmatpush2.msra.mxu0 0.0
    %707 = vmatprep.subr.mxu0 0.0
    %708 = vmatpush2.msra.mxu0 0.0
    %709 = vmatprep.mubr.f32.mxu0 0.0
    %710 = vmatmul.mubr.f32.gmra.mxu0 %v188
    %v711 = vpop.f32.mrf.mxu0
    %v712 = vadd.f32 0.0, %v711
    %v713 = vpop.f32.mrf.mxu0
    %714 = vdwg.mxu0
    %v715 = vadd.f32 %v368, %v641
    %v716 = vmul.f32 %v715, 0.5
    %v717 = vtanh.pop %v716
    %v718 = vadd.f32 %v717, 1.0
    %v719 = vmul.f32 %v718, 0.5
    %v720 = vadd.f32 %v370, %v643
    %v721 = vmul.f32 %v720, 0.5
    %v722 = vtanh.pop %v721
    %v723 = vadd.f32 %v722, 1.0
    %v724 = vmul.f32 %v723, 0.5
    %v725 = vadd.f32 %v712, %v572
    %v726 = vmul.f32 %v719, %v725
    %v727 = vadd.f32 %v481, %v726
    %v728 = vtanh.pop %v727
    %v729 = vsub.f32 1.0, %v724
    %v730 = vmul.f32 %v729, %v728
    %v731 = vmul.f32 %v724, %v188
    %v732 = vadd.f32 %v730, %v731
    %733 = vst [vmem:[#allocation2] sm:$0xff] %v732
    %734 = vmatprep.subr.mxu0 %v565
    %735 = vmatpush1.msra.mxu0 %v564
    %736 = vmatprep.subr.mxu0 %v562
    %737 = vmatpush1.msra.mxu0 %v561
    %738 = vmatprep.subr.mxu0 %v559
    %739 = vmatpush1.msra.mxu0 %v558
    %740 = vmatprep.subr.mxu0 %v556
    %741 = vmatpush1.msra.mxu0 %v555
    %742 = vmatprep.subr.mxu0 %v553
    %743 = vmatpush1.msra.mxu0 %v552
    %744 = vmatprep.subr.mxu0 %v550
    %745 = vmatpush1.msra.mxu0 %v549
    %746 = vmatprep.subr.mxu0 %v547
    %747 = vmatpush1.msra.mxu0 %v546
    %748 = vmatprep.subr.mxu0 %v544
    %749 = vmatpush1.msra.mxu0 %v543
    %750 = vmatprep.subr.mxu0 %v541
    %751 = vmatpush1.msra.mxu0 %v540
    %752 = vmatprep.subr.mxu0 %v538
    %753 = vmatpush1.msra.mxu0 %v537
    %754 = vmatprep.subr.mxu0 %v535
    %755 = vmatpush1.msra.mxu0 %v534
    %756 = vmatprep.subr.mxu0 %v532
    %757 = vmatpush1.msra.mxu0 %v531
    %758 = vmatprep.subr.mxu0 %v529
    %759 = vmatpush1.msra.mxu0 %v528
    %760 = vmatprep.subr.mxu0 %v526
    %761 = vmatpush1.msra.mxu0 %v525
    %762 = vmatprep.subr.mxu0 %v523
    %763 = vmatpush1.msra.mxu0 %v522
    %764 = vmatprep.subr.mxu0 %v520
    %765 = vmatpush1.msra.mxu0 %v519
    %766 = vmatprep.subr.mxu0 0.0
    %767 = vmatpush2.msra.mxu0 0.0
    %768 = vmatprep.subr.mxu0 0.0
    %769 = vmatpush2.msra.mxu0 0.0
    %770 = vmatprep.subr.mxu0 0.0
    %771 = vmatpush2.msra.mxu0 0.0
    %772 = vmatprep.subr.mxu0 0.0
    %773 = vmatpush2.msra.mxu0 0.0
    %774 = vmatprep.subr.mxu0 0.0
    %775 = vmatpush2.msra.mxu0 0.0
    %776 = vmatprep.subr.mxu0 0.0
    %777 = vmatpush2.msra.mxu0 0.0
    %778 = vmatprep.subr.mxu0 0.0
    %779 = vmatpush2.msra.mxu0 0.0
    %780 = vmatprep.subr.mxu0 0.0
    %781 = vmatpush2.msra.mxu0 0.0
    %782 = vmatprep.subr.mxu0 0.0
    %783 = vmatpush2.msra.mxu0 0.0
    %784 = vmatprep.subr.mxu0 0.0
    %785 = vmatpush2.msra.mxu0 0.0
    %786 = vmatprep.subr.mxu0 0.0
    %787 = vmatpush2.msra.mxu0 0.0
    %788 = vmatprep.subr.mxu0 0.0
    %789 = vmatpush2.msra.mxu0 0.0
    %790 = vmatprep.subr.mxu0 0.0
    %791 = vmatpush2.msra.mxu0 0.0
    %792 = vmatprep.subr.mxu0 0.0
    %793 = vmatpush2.msra.mxu0 0.0
    %794 = vmatprep.subr.mxu0 0.0
    %795 = vmatpush2.msra.mxu0 0.0
    %796 = vmatprep.subr.mxu0 0.0
    %797 = vmatpush2.msra.mxu0 0.0
    %798 = vmatprep.mubr.f32.mxu0 0.0
    %799 = vmatmul.mubr.f32.gmra.mxu0 %v732
    %v800 = vpop.f32.mrf.mxu0
    %v801 = vadd.f32 0.0, %v800
    %v802 = vpop.f32.mrf.mxu0
    %v803 = vadd.f32 0.0, %v802
    %804 = vdwg.mxu0
    %805 = vmatprep.subr.mxu0 0.0
    %806 = vmatpush1.msra.mxu0 %v566
    %807 = vmatprep.subr.mxu0 0.0
    %808 = vmatpush1.msra.mxu0 %v563
    %809 = vmatprep.subr.mxu0 0.0
    %810 = vmatpush1.msra.mxu0 %v560
    %811 = vmatprep.subr.mxu0 0.0
    %812 = vmatpush1.msra.mxu0 %v557
    %813 = vmatprep.subr.mxu0 0.0
    %814 = vmatpush1.msra.mxu0 %v554
    %815 = vmatprep.subr.mxu0 0.0
    %816 = vmatpush1.msra.mxu0 %v551
    %817 = vmatprep.subr.mxu0 0.0
    %818 = vmatpush1.msra.mxu0 %v548
    %819 = vmatprep.subr.mxu0 0.0
    %820 = vmatpush1.msra.mxu0 %v545
    %821 = vmatprep.subr.mxu0 0.0
    %822 = vmatpush1.msra.mxu0 %v542
    %823 = vmatprep.subr.mxu0 0.0
    %824 = vmatpush1.msra.mxu0 %v539
    %825 = vmatprep.subr.mxu0 0.0
    %826 = vmatpush1.msra.mxu0 %v536
    %827 = vmatprep.subr.mxu0 0.0
    %828 = vmatpush1.msra.mxu0 %v533
    %829 = vmatprep.subr.mxu0 0.0
    %830 = vmatpush1.msra.mxu0 %v530
    %831 = vmatprep.subr.mxu0 0.0
    %832 = vmatpush1.msra.mxu0 %v527
    %833 = vmatprep.subr.mxu0 0.0
    %834 = vmatpush1.msra.mxu0 %v524
    %835 = vmatprep.subr.mxu0 0.0
    %836 = vmatpush1.msra.mxu0 %v521
    %837 = vmatprep.subr.mxu0 0.0
    %838 = vmatpush2.msra.mxu0 0.0
    %839 = vmatprep.subr.mxu0 0.0
    %840 = vmatpush2.msra.mxu0 0.0
    %841 = vmatprep.subr.mxu0 0.0
    %842 = vmatpush2.msra.mxu0 0.0
    %843 = vmatprep.subr.mxu0 0.0
    %844 = vmatpush2.msra.mxu0 0.0
    %845 = vmatprep.subr.mxu0 0.0
    %846 = vmatpush2.msra.mxu0 0.0
    %847 = vmatprep.subr.mxu0 0.0
    %848 = vmatpush2.msra.mxu0 0.0
    %849 = vmatprep.subr.mxu0 0.0
    %850 = vmatpush2.msra.mxu0 0.0
    %851 = vmatprep.subr.mxu0 0.0
    %852 = vmatpush2.msra.mxu0 0.0
    %853 = vmatprep.subr.mxu0 0.0
    %854 = vmatpush2.msra.mxu0 0.0
    %855 = vmatprep.subr.mxu0 0.0
    %856 = vmatpush2.msra.mxu0 0.0
    %857 = vmatprep.subr.mxu0 0.0
    %858 = vmatpush2.msra.mxu0 0.0
    %859 = vmatprep.subr.mxu0 0.0
    %860 = vmatpush2.msra.mxu0 0.0
    %861 = vmatprep.subr.mxu0 0.0
    %862 = vmatpush2.msra.mxu0 0.0
    %863 = vmatprep.subr.mxu0 0.0
    %864 = vmatpush2.msra.mxu0 0.0
    %865 = vmatprep.subr.mxu0 0.0
    %866 = vmatpush2.msra.mxu0 0.0
    %867 = vmatprep.subr.mxu0 0.0
    %868 = vmatpush2.msra.mxu0 0.0
    %869 = vmatprep.mubr.f32.mxu0 0.0
    %870 = vmatmul.mubr.f32.gmra.mxu0 %v732
    %v871 = vpop.f32.mrf.mxu0
    %v872 = vadd.f32 0.0, %v871
    %v873 = vpop.f32.mrf.mxu0
    %874 = vdwg.mxu0
    %v875 = vadd.f32 %v374, %v801
    %v876 = vmul.f32 %v875, 0.5
    %v877 = vtanh.pop %v876
    %v878 = vadd.f32 %v877, 1.0
    %v879 = vmul.f32 %v878, 0.5
    %v880 = vadd.f32 %v376, %v803
    %v881 = vmul.f32 %v880, 0.5
    %v882 = vtanh.pop %v881
    %v883 = vadd.f32 %v882, 1.0
    %v884 = vmul.f32 %v883, 0.5
    %v885 = vadd.f32 %v872, %v572
    %v886 = vmul.f32 %v879, %v885
    %v887 = vadd.f32 %v486, %v886
    %v888 = vtanh.pop %v887
    %v889 = vsub.f32 1.0, %v884
    %v890 = vmul.f32 %v889, %v888
    %v891 = vmul.f32 %v884, %v732
    %v892 = vadd.f32 %v890, %v891
    %893 = vst [vmem:[#allocation2 + $0x8] sm:$0xff] %v892
    %894 = vmatprep.subr.mxu0 %v565
    %895 = vmatpush1.msra.mxu0 %v564
    %896 = vmatprep.subr.mxu0 %v562
    %897 = vmatpush1.msra.mxu0 %v561
    %898 = vmatprep.subr.mxu0 %v559
    %899 = vmatpush1.msra.mxu0 %v558
    %900 = vmatprep.subr.mxu0 %v556
    %901 = vmatpush1.msra.mxu0 %v555
    %902 = vmatprep.subr.mxu0 %v553
    %903 = vmatpush1.msra.mxu0 %v552
    %904 = vmatprep.subr.mxu0 %v550
    %905 = vmatpush1.msra.mxu0 %v549
    %906 = vmatprep.subr.mxu0 %v547
    %907 = vmatpush1.msra.mxu0 %v546
    %908 = vmatprep.subr.mxu0 %v544
    %909 = vmatpush1.msra.mxu0 %v543
    %910 = vmatprep.subr.mxu0 %v541
    %911 = vmatpush1.msra.mxu0 %v540
    %912 = vmatprep.subr.mxu0 %v538
    %913 = vmatpush1.msra.mxu0 %v537
    %914 = vmatprep.subr.mxu0 %v535
    %915 = vmatpush1.msra.mxu0 %v534
    %916 = vmatprep.subr.mxu0 %v532
    %917 = vmatpush1.msra.mxu0 %v531
    %918 = vmatprep.subr.mxu0 %v529
    %919 = vmatpush1.msra.mxu0 %v528
    %920 = vmatprep.subr.mxu0 %v526
    %921 = vmatpush1.msra.mxu0 %v525
    %922 = vmatprep.subr.mxu0 %v523
    %923 = vmatpush1.msra.mxu0 %v522
    %924 = vmatprep.subr.mxu0 %v520
    %925 = vmatpush1.msra.mxu0 %v519
    %926 = vmatprep.subr.mxu0 0.0
    %927 = vmatpush2.msra.mxu0 0.0
    %928 = vmatprep.subr.mxu0 0.0
    %929 = vmatpush2.msra.mxu0 0.0
    %930 = vmatprep.subr.mxu0 0.0
    %931 = vmatpush2.msra.mxu0 0.0
    %932 = vmatprep.subr.mxu0 0.0
    %933 = vmatpush2.msra.mxu0 0.0
    %934 = vmatprep.subr.mxu0 0.0
    %935 = vmatpush2.msra.mxu0 0.0
    %936 = vmatprep.subr.mxu0 0.0
    %937 = vmatpush2.msra.mxu0 0.0
    %938 = vmatprep.subr.mxu0 0.0
    %939 = vmatpush2.msra.mxu0 0.0
    %940 = vmatprep.subr.mxu0 0.0
    %941 = vmatpush2.msra.mxu0 0.0
    %942 = vmatprep.subr.mxu0 0.0
    %943 = vmatpush2.msra.mxu0 0.0
    %944 = vmatprep.subr.mxu0 0.0
    %945 = vmatpush2.msra.mxu0 0.0
    %946 = vmatprep.subr.mxu0 0.0
    %947 = vmatpush2.msra.mxu0 0.0
    %948 = vmatprep.subr.mxu0 0.0
    %949 = vmatpush2.msra.mxu0 0.0
    %950 = vmatprep.subr.mxu0 0.0
    %951 = vmatpush2.msra.mxu0 0.0
    %952 = vmatprep.subr.mxu0 0.0
    %953 = vmatpush2.msra.mxu0 0.0
    %954 = vmatprep.subr.mxu0 0.0
    %955 = vmatpush2.msra.mxu0 0.0
    %956 = vmatprep.subr.mxu0 0.0
    %957 = vmatpush2.msra.mxu0 0.0
    %958 = vmatprep.mubr.f32.mxu0 0.0
    %959 = vmatmul.mubr.f32.gmra.mxu0 %v892
    %v960 = vpop.f32.mrf.mxu0
    %v961 = vadd.f32 0.0, %v960
    %v962 = vpop.f32.mrf.mxu0
    %v963 = vadd.f32 0.0, %v962
    %964 = vdwg.mxu0
    %965 = vmatprep.subr.mxu0 0.0
    %966 = vmatpush1.msra.mxu0 %v566
    %967 = vmatprep.subr.mxu0 0.0
    %968 = vmatpush1.msra.mxu0 %v563
    %969 = vmatprep.subr.mxu0 0.0
    %970 = vmatpush1.msra.mxu0 %v560
    %971 = vmatprep.subr.mxu0 0.0
    %972 = vmatpush1.msra.mxu0 %v557
    %973 = vmatprep.subr.mxu0 0.0
    %974 = vmatpush1.msra.mxu0 %v554
    %975 = vmatprep.subr.mxu0 0.0
    %976 = vmatpush1.msra.mxu0 %v551
    %977 = vmatprep.subr.mxu0 0.0
    %978 = vmatpush1.msra.mxu0 %v548
    %979 = vmatprep.subr.mxu0 0.0
    %980 = vmatpush1.msra.mxu0 %v545
    %981 = vmatprep.subr.mxu0 0.0
    %982 = vmatpush1.msra.mxu0 %v542
    %983 = vmatprep.subr.mxu0 0.0
    %984 = vmatpush1.msra.mxu0 %v539
    %985 = vmatprep.subr.mxu0 0.0
    %986 = vmatpush1.msra.mxu0 %v536
    %987 = vmatprep.subr.mxu0 0.0
    %988 = vmatpush1.msra.mxu0 %v533
    %989 = vmatprep.subr.mxu0 0.0
    %990 = vmatpush1.msra.mxu0 %v530
    %991 = vmatprep.subr.mxu0 0.0
    %992 = vmatpush1.msra.mxu0 %v527
    %993 = vmatprep.subr.mxu0 0.0
    %994 = vmatpush1.msra.mxu0 %v524
    %995 = vmatprep.subr.mxu0 0.0
    %996 = vmatpush1.msra.mxu0 %v521
    %997 = vmatprep.subr.mxu0 0.0
    %998 = vmatpush2.msra.mxu0 0.0
    %999 = vmatprep.subr.mxu0 0.0
    %1000 = vmatpush2.msra.mxu0 0.0
    %1001 = vmatprep.subr.mxu0 0.0
    %1002 = vmatpush2.msra.mxu0 0.0
    %1003 = vmatprep.subr.mxu0 0.0
    %1004 = vmatpush2.msra.mxu0 0.0
    %1005 = vmatprep.subr.mxu0 0.0
    %1006 = vmatpush2.msra.mxu0 0.0
    %1007 = vmatprep.subr.mxu0 0.0
    %1008 = vmatpush2.msra.mxu0 0.0
    %1009 = vmatprep.subr.mxu0 0.0
    %1010 = vmatpush2.msra.mxu0 0.0
    %1011 = vmatprep.subr.mxu0 0.0
    %1012 = vmatpush2.msra.mxu0 0.0
    %1013 = vmatprep.subr.mxu0 0.0
    %1014 = vmatpush2.msra.mxu0 0.0
    %1015 = vmatprep.subr.mxu0 0.0
    %1016 = vmatpush2.msra.mxu0 0.0
    %1017 = vmatprep.subr.mxu0 0.0
    %1018 = vmatpush2.msra.mxu0 0.0
    %1019 = vmatprep.subr.mxu0 0.0
    %1020 = vmatpush2.msra.mxu0 0.0
    %1021 = vmatprep.subr.mxu0 0.0
    %1022 = vmatpush2.msra.mxu0 0.0
    %1023 = vmatprep.subr.mxu0 0.0
    %1024 = vmatpush2.msra.mxu0 0.0
    %1025 = vmatprep.subr.mxu0 0.0
    %1026 = vmatpush2.msra.mxu0 0.0
    %1027 = vmatprep.subr.mxu0 0.0
    %1028 = vmatpush2.msra.mxu0 0.0
    %1029 = vmatprep.mubr.f32.mxu0 0.0
    %1030 = vmatmul.mubr.f32.gmra.mxu0 %v892
    %v1031 = vpop.f32.mrf.mxu0
    %v1032 = vadd.f32 0.0, %v1031
    %v1033 = vpop.f32.mrf.mxu0
    %1034 = vdwg.mxu0
    %v1035 = vadd.f32 %v380, %v961
    %v1036 = vmul.f32 %v1035, 0.5
    %v1037 = vtanh.pop %v1036
    %v1038 = vadd.f32 %v1037, 1.0
    %v1039 = vmul.f32 %v1038, 0.5
    %v1040 = vadd.f32 %v382, %v963
    %v1041 = vmul.f32 %v1040, 0.5
    %v1042 = vtanh.pop %v1041
    %v1043 = vadd.f32 %v1042, 1.0
    %v1044 = vmul.f32 %v1043, 0.5
    %v1045 = vadd.f32 %v1032, %v572
    %v1046 = vmul.f32 %v1039, %v1045
    %v1047 = vadd.f32 %v491, %v1046
    %v1048 = vtanh.pop %v1047
    %v1049 = vsub.f32 1.0, %v1044
    %v1050 = vmul.f32 %v1049, %v1048
    %v1051 = vmul.f32 %v1044, %v892
    %v1052 = vadd.f32 %v1050, %v1051
    %1053 = vst [vmem:[#allocation2 + $0x10] sm:$0xff] %v1052
    %1054 = vmatprep.subr.mxu0 %v565
    %1055 = vmatpush1.msra.mxu0 %v564
    %1056 = vmatprep.subr.mxu0 %v562
    %1057 = vmatpush1.msra.mxu0 %v561
    %1058 = vmatprep.subr.mxu0 %v559
    %1059 = vmatpush1.msra.mxu0 %v558
    %1060 = vmatprep.subr.mxu0 %v556
    %1061 = vmatpush1.msra.mxu0 %v555
    %1062 = vmatprep.subr.mxu0 %v553
    %1063 = vmatpush1.msra.mxu0 %v552
    %1064 = vmatprep.subr.mxu0 %v550
    %1065 = vmatpush1.msra.mxu0 %v549
    %1066 = vmatprep.subr.mxu0 %v547
    %1067 = vmatpush1.msra.mxu0 %v546
    %1068 = vmatprep.subr.mxu0 %v544
    %1069 = vmatpush1.msra.mxu0 %v543
    %1070 = vmatprep.subr.mxu0 %v541
    %1071 = vmatpush1.msra.mxu0 %v540
    %1072 = vmatprep.subr.mxu0 %v538
    %1073 = vmatpush1.msra.mxu0 %v537
    %1074 = vmatprep.subr.mxu0 %v535
    %1075 = vmatpush1.msra.mxu0 %v534
    %1076 = vmatprep.subr.mxu0 %v532
    %1077 = vmatpush1.msra.mxu0 %v531
    %1078 = vmatprep.subr.mxu0 %v529
    %1079 = vmatpush1.msra.mxu0 %v528
    %1080 = vmatprep.subr.mxu0 %v526
    %1081 = vmatpush1.msra.mxu0 %v525
    %1082 = vmatprep.subr.mxu0 %v523
    %1083 = vmatpush1.msra.mxu0 %v522
    %1084 = vmatprep.subr.mxu0 %v520
    %1085 = vmatpush1.msra.mxu0 %v519
    %1086 = vmatprep.subr.mxu0 0.0
    %1087 = vmatpush2.msra.mxu0 0.0
    %1088 = vmatprep.subr.mxu0 0.0
    %1089 = vmatpush2.msra.mxu0 0.0
    %1090 = vmatprep.subr.mxu0 0.0
    %1091 = vmatpush2.msra.mxu0 0.0
    %1092 = vmatprep.subr.mxu0 0.0
    %1093 = vmatpush2.msra.mxu0 0.0
    %1094 = vmatprep.subr.mxu0 0.0
    %1095 = vmatpush2.msra.mxu0 0.0
    %1096 = vmatprep.subr.mxu0 0.0
    %1097 = vmatpush2.msra.mxu0 0.0
    %1098 = vmatprep.subr.mxu0 0.0
    %1099 = vmatpush2.msra.mxu0 0.0
    %1100 = vmatprep.subr.mxu0 0.0
    %1101 = vmatpush2.msra.mxu0 0.0
    %1102 = vmatprep.subr.mxu0 0.0
    %1103 = vmatpush2.msra.mxu0 0.0
    %1104 = vmatprep.subr.mxu0 0.0
    %1105 = vmatpush2.msra.mxu0 0.0
    %1106 = vmatprep.subr.mxu0 0.0
    %1107 = vmatpush2.msra.mxu0 0.0
    %1108 = vmatprep.subr.mxu0 0.0
    %1109 = vmatpush2.msra.mxu0 0.0
    %1110 = vmatprep.subr.mxu0 0.0
    %1111 = vmatpush2.msra.mxu0 0.0
    %1112 = vmatprep.subr.mxu0 0.0
    %1113 = vmatpush2.msra.mxu0 0.0
    %1114 = vmatprep.subr.mxu0 0.0
    %1115 = vmatpush2.msra.mxu0 0.0
    %1116 = vmatprep.subr.mxu0 0.0
    %1117 = vmatpush2.msra.mxu0 0.0
    %1118 = vmatprep.mubr.f32.mxu0 0.0
    %1119 = vmatmul.mubr.f32.gmra.mxu0 %v1052
    %v1120 = vpop.f32.mrf.mxu0
    %v1121 = vadd.f32 0.0, %v1120
    %v1122 = vpop.f32.mrf.mxu0
    %v1123 = vadd.f32 0.0, %v1122
    %1124 = vdwg.mxu0
    %1125 = vmatprep.subr.mxu0 0.0
    %1126 = vmatpush1.msra.mxu0 %v566
    %1127 = vmatprep.subr.mxu0 0.0
    %1128 = vmatpush1.msra.mxu0 %v563
    %1129 = vmatprep.subr.mxu0 0.0
    %1130 = vmatpush1.msra.mxu0 %v560
    %1131 = vmatprep.subr.mxu0 0.0
    %1132 = vmatpush1.msra.mxu0 %v557
    %1133 = vmatprep.subr.mxu0 0.0
    %1134 = vmatpush1.msra.mxu0 %v554
    %1135 = vmatprep.subr.mxu0 0.0
    %1136 = vmatpush1.msra.mxu0 %v551
    %1137 = vmatprep.subr.mxu0 0.0
    %1138 = vmatpush1.msra.mxu0 %v548
    %1139 = vmatprep.subr.mxu0 0.0
    %1140 = vmatpush1.msra.mxu0 %v545
    %1141 = vmatprep.subr.mxu0 0.0
    %1142 = vmatpush1.msra.mxu0 %v542
    %1143 = vmatprep.subr.mxu0 0.0
    %1144 = vmatpush1.msra.mxu0 %v539
    %1145 = vmatprep.subr.mxu0 0.0
    %1146 = vmatpush1.msra.mxu0 %v536
    %1147 = vmatprep.subr.mxu0 0.0
    %1148 = vmatpush1.msra.mxu0 %v533
    %1149 = vmatprep.subr.mxu0 0.0
    %1150 = vmatpush1.msra.mxu0 %v530
    %1151 = vmatprep.subr.mxu0 0.0
    %1152 = vmatpush1.msra.mxu0 %v527
    %1153 = vmatprep.subr.mxu0 0.0
    %1154 = vmatpush1.msra.mxu0 %v524
    %1155 = vmatprep.subr.mxu0 0.0
    %1156 = vmatpush1.msra.mxu0 %v521
    %1157 = vmatprep.subr.mxu0 0.0
    %1158 = vmatpush2.msra.mxu0 0.0
    %1159 = vmatprep.subr.mxu0 0.0
    %1160 = vmatpush2.msra.mxu0 0.0
    %1161 = vmatprep.subr.mxu0 0.0
    %1162 = vmatpush2.msra.mxu0 0.0
    %1163 = vmatprep.subr.mxu0 0.0
    %1164 = vmatpush2.msra.mxu0 0.0
    %1165 = vmatprep.subr.mxu0 0.0
    %1166 = vmatpush2.msra.mxu0 0.0
    %1167 = vmatprep.subr.mxu0 0.0
    %1168 = vmatpush2.msra.mxu0 0.0
    %1169 = vmatprep.subr.mxu0 0.0
    %1170 = vmatpush2.msra.mxu0 0.0
    %1171 = vmatprep.subr.mxu0 0.0
    %1172 = vmatpush2.msra.mxu0 0.0
    %1173 = vmatprep.subr.mxu0 0.0
    %1174 = vmatpush2.msra.mxu0 0.0
    %1175 = vmatprep.subr.mxu0 0.0
    %1176 = vmatpush2.msra.mxu0 0.0
    %1177 = vmatprep.subr.mxu0 0.0
    %1178 = vmatpush2.msra.mxu0 0.0
    %1179 = vmatprep.subr.mxu0 0.0
    %1180 = vmatpush2.msra.mxu0 0.0
    %1181 = vmatprep.subr.mxu0 0.0
    %1182 = vmatpush2.msra.mxu0 0.0
    %1183 = vmatprep.subr.mxu0 0.0
    %1184 = vmatpush2.msra.mxu0 0.0
    %1185 = vmatprep.subr.mxu0 0.0
    %1186 = vmatpush2.msra.mxu0 0.0
    %1187 = vmatprep.subr.mxu0 0.0
    %1188 = vmatpush2.msra.mxu0 0.0
    %1189 = vmatprep.mubr.f32.mxu0 0.0
    %1190 = vmatmul.mubr.f32.gmra.mxu0 %v1052
    %v1191 = vpop.f32.mrf.mxu0
    %v1192 = vadd.f32 0.0, %v1191
    %v1193 = vpop.f32.mrf.mxu0
    %1194 = vdwg.mxu0
    %v1195 = vadd.f32 %v386, %v1121
    %v1196 = vmul.f32 %v1195, 0.5
    %v1197 = vtanh.pop %v1196
    %v1198 = vadd.f32 %v1197, 1.0
    %v1199 = vmul.f32 %v1198, 0.5
    %v1200 = vadd.f32 %v388, %v1123
    %v1201 = vmul.f32 %v1200, 0.5
    %v1202 = vtanh.pop %v1201
    %v1203 = vadd.f32 %v1202, 1.0
    %v1204 = vmul.f32 %v1203, 0.5
    %v1205 = vadd.f32 %v1192, %v572
    %v1206 = vmul.f32 %v1199, %v1205
    %v1207 = vadd.f32 %v496, %v1206
    %v1208 = vtanh.pop %v1207
    %v1209 = vsub.f32 1.0, %v1204
    %v1210 = vmul.f32 %v1209, %v1208
    %v1211 = vmul.f32 %v1204, %v1052
    %v1212 = vadd.f32 %v1210, %v1211
    %1213 = vst [vmem:[#allocation2 + $0x18] sm:$0xff] %v1212
    %1214 = vmatprep.subr.mxu0 %v565
    %1215 = vmatpush1.msra.mxu0 %v564
    %1216 = vmatprep.subr.mxu0 %v562
    %1217 = vmatpush1.msra.mxu0 %v561
    %1218 = vmatprep.subr.mxu0 %v559
    %1219 = vmatpush1.msra.mxu0 %v558
    %1220 = vmatprep.subr.mxu0 %v556
    %1221 = vmatpush1.msra.mxu0 %v555
    %1222 = vmatprep.subr.mxu0 %v553
    %1223 = vmatpush1.msra.mxu0 %v552
    %1224 = vmatprep.subr.mxu0 %v550
    %1225 = vmatpush1.msra.mxu0 %v549
    %1226 = vmatprep.subr.mxu0 %v547
    %1227 = vmatpush1.msra.mxu0 %v546
    %1228 = vmatprep.subr.mxu0 %v544
    %1229 = vmatpush1.msra.mxu0 %v543
    %1230 = vmatprep.subr.mxu0 %v541
    %1231 = vmatpush1.msra.mxu0 %v540
    %1232 = vmatprep.subr.mxu0 %v538
    %1233 = vmatpush1.msra.mxu0 %v537
    %1234 = vmatprep.subr.mxu0 %v535
    %1235 = vmatpush1.msra.mxu0 %v534
    %1236 = vmatprep.subr.mxu0 %v532
    %1237 = vmatpush1.msra.mxu0 %v531
    %1238 = vmatprep.subr.mxu0 %v529
    %1239 = vmatpush1.msra.mxu0 %v528
    %1240 = vmatprep.subr.mxu0 %v526
    %1241 = vmatpush1.msra.mxu0 %v525
    %1242 = vmatprep.subr.mxu0 %v523
    %1243 = vmatpush1.msra.mxu0 %v522
    %1244 = vmatprep.subr.mxu0 %v520
    %1245 = vmatpush1.msra.mxu0 %v519
    %1246 = vmatprep.subr.mxu0 0.0
    %1247 = vmatpush2.msra.mxu0 0.0
    %1248 = vmatprep.subr.mxu0 0.0
    %1249 = vmatpush2.msra.mxu0 0.0
    %1250 = vmatprep.subr.mxu0 0.0
    %1251 = vmatpush2.msra.mxu0 0.0
    %1252 = vmatprep.subr.mxu0 0.0
    %1253 = vmatpush2.msra.mxu0 0.0
    %1254 = vmatprep.subr.mxu0 0.0
    %1255 = vmatpush2.msra.mxu0 0.0
    %1256 = vmatprep.subr.mxu0 0.0
    %1257 = vmatpush2.msra.mxu0 0.0
    %1258 = vmatprep.subr.mxu0 0.0
    %1259 = vmatpush2.msra.mxu0 0.0
    %1260 = vmatprep.subr.mxu0 0.0
    %1261 = vmatpush2.msra.mxu0 0.0
    %1262 = vmatprep.subr.mxu0 0.0
    %1263 = vmatpush2.msra.mxu0 0.0
    %1264 = vmatprep.subr.mxu0 0.0
    %1265 = vmatpush2.msra.mxu0 0.0
    %1266 = vmatprep.subr.mxu0 0.0
    %1267 = vmatpush2.msra.mxu0 0.0
    %1268 = vmatprep.subr.mxu0 0.0
    %1269 = vmatpush2.msra.mxu0 0.0
    %1270 = vmatprep.subr.mxu0 0.0
    %1271 = vmatpush2.msra.mxu0 0.0
    %1272 = vmatprep.subr.mxu0 0.0
    %1273 = vmatpush2.msra.mxu0 0.0
    %1274 = vmatprep.subr.mxu0 0.0
    %1275 = vmatpush2.msra.mxu0 0.0
    %1276 = vmatprep.subr.mxu0 0.0
    %1277 = vmatpush2.msra.mxu0 0.0
    %1278 = vmatprep.mubr.f32.mxu0 0.0
    %1279 = vmatmul.mubr.f32.gmra.mxu0 %v1212
    %v1280 = vpop.f32.mrf.mxu0
    %v1281 = vadd.f32 0.0, %v1280
    %v1282 = vpop.f32.mrf.mxu0
    %v1283 = vadd.f32 0.0, %v1282
    %1284 = vdwg.mxu0
    %1285 = vmatprep.subr.mxu0 0.0
    %1286 = vmatpush1.msra.mxu0 %v566
    %1287 = vmatprep.subr.mxu0 0.0
    %1288 = vmatpush1.msra.mxu0 %v563
    %1289 = vmatprep.subr.mxu0 0.0
    %1290 = vmatpush1.msra.mxu0 %v560
    %1291 = vmatprep.subr.mxu0 0.0
    %1292 = vmatpush1.msra.mxu0 %v557
    %1293 = vmatprep.subr.mxu0 0.0
    %1294 = vmatpush1.msra.mxu0 %v554
    %1295 = vmatprep.subr.mxu0 0.0
    %1296 = vmatpush1.msra.mxu0 %v551
    %1297 = vmatprep.subr.mxu0 0.0
    %1298 = vmatpush1.msra.mxu0 %v548
    %1299 = vmatprep.subr.mxu0 0.0
    %1300 = vmatpush1.msra.mxu0 %v545
    %1301 = vmatprep.subr.mxu0 0.0
    %1302 = vmatpush1.msra.mxu0 %v542
    %1303 = vmatprep.subr.mxu0 0.0
    %1304 = vmatpush1.msra.mxu0 %v539
    %1305 = vmatprep.subr.mxu0 0.0
    %1306 = vmatpush1.msra.mxu0 %v536
    %1307 = vmatprep.subr.mxu0 0.0
    %1308 = vmatpush1.msra.mxu0 %v533
    %1309 = vmatprep.subr.mxu0 0.0
    %1310 = vmatpush1.msra.mxu0 %v530
    %1311 = vmatprep.subr.mxu0 0.0
    %1312 = vmatpush1.msra.mxu0 %v527
    %1313 = vmatprep.subr.mxu0 0.0
    %1314 = vmatpush1.msra.mxu0 %v524
    %1315 = vmatprep.subr.mxu0 0.0
    %1316 = vmatpush1.msra.mxu0 %v521
    %1317 = vmatprep.subr.mxu0 0.0
    %1318 = vmatpush2.msra.mxu0 0.0
    %1319 = vmatprep.subr.mxu0 0.0
    %1320 = vmatpush2.msra.mxu0 0.0
    %1321 = vmatprep.subr.mxu0 0.0
    %1322 = vmatpush2.msra.mxu0 0.0
    %1323 = vmatprep.subr.mxu0 0.0
    %1324 = vmatpush2.msra.mxu0 0.0
    %1325 = vmatprep.subr.mxu0 0.0
    %1326 = vmatpush2.msra.mxu0 0.0
    %1327 = vmatprep.subr.mxu0 0.0
    %1328 = vmatpush2.msra.mxu0 0.0
    %1329 = vmatprep.subr.mxu0 0.0
    %1330 = vmatpush2.msra.mxu0 0.0
    %1331 = vmatprep.subr.mxu0 0.0
    %1332 = vmatpush2.msra.mxu0 0.0
    %1333 = vmatprep.subr.mxu0 0.0
    %1334 = vmatpush2.msra.mxu0 0.0
    %1335 = vmatprep.subr.mxu0 0.0
    %1336 = vmatpush2.msra.mxu0 0.0
    %1337 = vmatprep.subr.mxu0 0.0
    %1338 = vmatpush2.msra.mxu0 0.0
    %1339 = vmatprep.subr.mxu0 0.0
    %1340 = vmatpush2.msra.mxu0 0.0
    %1341 = vmatprep.subr.mxu0 0.0
    %1342 = vmatpush2.msra.mxu0 0.0
    %1343 = vmatprep.subr.mxu0 0.0
    %1344 = vmatpush2.msra.mxu0 0.0
    %1345 = vmatprep.subr.mxu0 0.0
    %1346 = vmatpush2.msra.mxu0 0.0
    %1347 = vmatprep.subr.mxu0 0.0
    %1348 = vmatpush2.msra.mxu0 0.0
    %1349 = vmatprep.mubr.f32.mxu0 0.0
    %1350 = vmatmul.mubr.f32.gmra.mxu0 %v1212
    %v1351 = vpop.f32.mrf.mxu0
    %v1352 = vadd.f32 0.0, %v1351
    %v1353 = vpop.f32.mrf.mxu0
    %1354 = vdwg.mxu0
    %v1355 = vadd.f32 %v392, %v1281
    %v1356 = vmul.f32 %v1355, 0.5
    %v1357 = vtanh.pop %v1356
    %v1358 = vadd.f32 %v1357, 1.0
    %v1359 = vmul.f32 %v1358, 0.5
    %v1360 = vadd.f32 %v394, %v1283
    %v1361 = vmul.f32 %v1360, 0.5
    %v1362 = vtanh.pop %v1361
    %v1363 = vadd.f32 %v1362, 1.0
    %v1364 = vmul.f32 %v1363, 0.5
    %v1365 = vadd.f32 %v1352, %v572
    %v1366 = vmul.f32 %v1359, %v1365
    %v1367 = vadd.f32 %v501, %v1366
    %v1368 = vtanh.pop %v1367
    %v1369 = vsub.f32 1.0, %v1364
    %v1370 = vmul.f32 %v1369, %v1368
    %v1371 = vmul.f32 %v1364, %v1212
    %v1372 = vadd.f32 %v1370, %v1371
    %1373 = vst [vmem:[#allocation2 + $0x20] sm:$0xff] %v1372
    %1374 = vmatprep.subr.mxu0 %v565
    %1375 = vmatpush1.msra.mxu0 %v564
    %1376 = vmatprep.subr.mxu0 %v562
    %1377 = vmatpush1.msra.mxu0 %v561
    %1378 = vmatprep.subr.mxu0 %v559
    %1379 = vmatpush1.msra.mxu0 %v558
    %1380 = vmatprep.subr.mxu0 %v556
    %1381 = vmatpush1.msra.mxu0 %v555
    %1382 = vmatprep.subr.mxu0 %v553
    %1383 = vmatpush1.msra.mxu0 %v552
    %1384 = vmatprep.subr.mxu0 %v550
    %1385 = vmatpush1.msra.mxu0 %v549
    %1386 = vmatprep.subr.mxu0 %v547
    %1387 = vmatpush1.msra.mxu0 %v546
    %1388 = vmatprep.subr.mxu0 %v544
    %1389 = vmatpush1.msra.mxu0 %v543
    %1390 = vmatprep.subr.mxu0 %v541
    %1391 = vmatpush1.msra.mxu0 %v540
    %1392 = vmatprep.subr.mxu0 %v538
    %1393 = vmatpush1.msra.mxu0 %v537
    %1394 = vmatprep.subr.mxu0 %v535
    %1395 = vmatpush1.msra.mxu0 %v534
    %1396 = vmatprep.subr.mxu0 %v532
    %1397 = vmatpush1.msra.mxu0 %v531
    %1398 = vmatprep.subr.mxu0 %v529
    %1399 = vmatpush1.msra.mxu0 %v528
    %1400 = vmatprep.subr.mxu0 %v526
    %1401 = vmatpush1.msra.mxu0 %v525
    %1402 = vmatprep.subr.mxu0 %v523
    %1403 = vmatpush1.msra.mxu0 %v522
    %1404 = vmatprep.subr.mxu0 %v520
    %1405 = vmatpush1.msra.mxu0 %v519
    %1406 = vmatprep.subr.mxu0 0.0
    %1407 = vmatpush2.msra.mxu0 0.0
    %1408 = vmatprep.subr.mxu0 0.0
    %1409 = vmatpush2.msra.mxu0 0.0
    %1410 = vmatprep.subr.mxu0 0.0
    %1411 = vmatpush2.msra.mxu0 0.0
    %1412 = vmatprep.subr.mxu0 0.0
    %1413 = vmatpush2.msra.mxu0 0.0
    %1414 = vmatprep.subr.mxu0 0.0
    %1415 = vmatpush2.msra.mxu0 0.0
    %1416 = vmatprep.subr.mxu0 0.0
    %1417 = vmatpush2.msra.mxu0 0.0
    %1418 = vmatprep.subr.mxu0 0.0
    %1419 = vmatpush2.msra.mxu0 0.0
    %1420 = vmatprep.subr.mxu0 0.0
    %1421 = vmatpush2.msra.mxu0 0.0
    %1422 = vmatprep.subr.mxu0 0.0
    %1423 = vmatpush2.msra.mxu0 0.0
    %1424 = vmatprep.subr.mxu0 0.0
    %1425 = vmatpush2.msra.mxu0 0.0
    %1426 = vmatprep.subr.mxu0 0.0
    %1427 = vmatpush2.msra.mxu0 0.0
    %1428 = vmatprep.subr.mxu0 0.0
    %1429 = vmatpush2.msra.mxu0 0.0
    %1430 = vmatprep.subr.mxu0 0.0
    %1431 = vmatpush2.msra.mxu0 0.0
    %1432 = vmatprep.subr.mxu0 0.0
    %1433 = vmatpush2.msra.mxu0 0.0
    %1434 = vmatprep.subr.mxu0 0.0
    %1435 = vmatpush2.msra.mxu0 0.0
    %1436 = vmatprep.subr.mxu0 0.0
    %1437 = vmatpush2.msra.mxu0 0.0
    %1438 = vmatprep.mubr.f32.mxu0 0.0
    %1439 = vmatmul.mubr.f32.gmra.mxu0 %v1372
    %v1440 = vpop.f32.mrf.mxu0
    %v1441 = vadd.f32 0.0, %v1440
    %v1442 = vpop.f32.mrf.mxu0
    %v1443 = vadd.f32 0.0, %v1442
    %1444 = vdwg.mxu0
    %1445 = vmatprep.subr.mxu0 0.0
    %1446 = vmatpush1.msra.mxu0 %v566
    %1447 = vmatprep.subr.mxu0 0.0
    %1448 = vmatpush1.msra.mxu0 %v563
    %1449 = vmatprep.subr.mxu0 0.0
    %1450 = vmatpush1.msra.mxu0 %v560
    %1451 = vmatprep.subr.mxu0 0.0
    %1452 = vmatpush1.msra.mxu0 %v557
    %1453 = vmatprep.subr.mxu0 0.0
    %1454 = vmatpush1.msra.mxu0 %v554
    %1455 = vmatprep.subr.mxu0 0.0
    %1456 = vmatpush1.msra.mxu0 %v551
    %1457 = vmatprep.subr.mxu0 0.0
    %1458 = vmatpush1.msra.mxu0 %v548
    %1459 = vmatprep.subr.mxu0 0.0
    %1460 = vmatpush1.msra.mxu0 %v545
    %1461 = vmatprep.subr.mxu0 0.0
    %1462 = vmatpush1.msra.mxu0 %v542
    %1463 = vmatprep.subr.mxu0 0.0
    %1464 = vmatpush1.msra.mxu0 %v539
    %1465 = vmatprep.subr.mxu0 0.0
    %1466 = vmatpush1.msra.mxu0 %v536
    %1467 = vmatprep.subr.mxu0 0.0
    %1468 = vmatpush1.msra.mxu0 %v533
    %1469 = vmatprep.subr.mxu0 0.0
    %1470 = vmatpush1.msra.mxu0 %v530
    %1471 = vmatprep.subr.mxu0 0.0
    %1472 = vmatpush1.msra.mxu0 %v527
    %1473 = vmatprep.subr.mxu0 0.0
    %1474 = vmatpush1.msra.mxu0 %v524
    %1475 = vmatprep.subr.mxu0 0.0
    %1476 = vmatpush1.msra.mxu0 %v521
    %1477 = vmatprep.subr.mxu0 0.0
    %1478 = vmatpush2.msra.mxu0 0.0
    %1479 = vmatprep.subr.mxu0 0.0
    %1480 = vmatpush2.msra.mxu0 0.0
    %1481 = vmatprep.subr.mxu0 0.0
    %1482 = vmatpush2.msra.mxu0 0.0
    %1483 = vmatprep.subr.mxu0 0.0
    %1484 = vmatpush2.msra.mxu0 0.0
    %1485 = vmatprep.subr.mxu0 0.0
    %1486 = vmatpush2.msra.mxu0 0.0
    %1487 = vmatprep.subr.mxu0 0.0
    %1488 = vmatpush2.msra.mxu0 0.0
    %1489 = vmatprep.subr.mxu0 0.0
    %1490 = vmatpush2.msra.mxu0 0.0
    %1491 = vmatprep.subr.mxu0 0.0
    %1492 = vmatpush2.msra.mxu0 0.0
    %1493 = vmatprep.subr.mxu0 0.0
    %1494 = vmatpush2.msra.mxu0 0.0
    %1495 = vmatprep.subr.mxu0 0.0
    %1496 = vmatpush2.msra.mxu0 0.0
    %1497 = vmatprep.subr.mxu0 0.0
    %1498 = vmatpush2.msra.mxu0 0.0
    %1499 = vmatprep.subr.mxu0 0.0
    %1500 = vmatpush2.msra.mxu0 0.0
    %1501 = vmatprep.subr.mxu0 0.0
    %1502 = vmatpush2.msra.mxu0 0.0
    %1503 = vmatprep.subr.mxu0 0.0
    %1504 = vmatpush2.msra.mxu0 0.0
    %1505 = vmatprep.subr.mxu0 0.0
    %1506 = vmatpush2.msra.mxu0 0.0
    %1507 = vmatprep.subr.mxu0 0.0
    %1508 = vmatpush2.msra.mxu0 0.0
    %1509 = vmatprep.mubr.f32.mxu0 0.0
    %1510 = vmatmul.mubr.f32.gmra.mxu0 %v1372
    %v1511 = vpop.f32.mrf.mxu0
    %v1512 = vadd.f32 0.0, %v1511
    %v1513 = vpop.f32.mrf.mxu0
    %1514 = vdwg.mxu0
    %v1515 = vadd.f32 %v398, %v1441
    %v1516 = vmul.f32 %v1515, 0.5
    %v1517 = vtanh.pop %v1516
    %v1518 = vadd.f32 %v1517, 1.0
    %v1519 = vmul.f32 %v1518, 0.5
    %v1520 = vadd.f32 %v400, %v1443
    %v1521 = vmul.f32 %v1520, 0.5
    %v1522 = vtanh.pop %v1521
    %v1523 = vadd.f32 %v1522, 1.0
    %v1524 = vmul.f32 %v1523, 0.5
    %v1525 = vadd.f32 %v1512, %v572
    %v1526 = vmul.f32 %v1519, %v1525
    %v1527 = vadd.f32 %v506, %v1526
    %v1528 = vtanh.pop %v1527
    %v1529 = vsub.f32 1.0, %v1524
    %v1530 = vmul.f32 %v1529, %v1528
    %v1531 = vmul.f32 %v1524, %v1372
    %v1532 = vadd.f32 %v1530, %v1531
    %1533 = vst [vmem:[#allocation2 + $0x28] sm:$0xff] %v1532
    %1534 = vmatprep.subr.mxu0 %v565
    %1535 = vmatpush1.msra.mxu0 %v564
    %1536 = vmatprep.subr.mxu0 %v562
    %1537 = vmatpush1.msra.mxu0 %v561
    %1538 = vmatprep.subr.mxu0 %v559
    %1539 = vmatpush1.msra.mxu0 %v558
    %1540 = vmatprep.subr.mxu0 %v556
    %1541 = vmatpush1.msra.mxu0 %v555
    %1542 = vmatprep.subr.mxu0 %v553
    %1543 = vmatpush1.msra.mxu0 %v552
    %1544 = vmatprep.subr.mxu0 %v550
    %1545 = vmatpush1.msra.mxu0 %v549
    %1546 = vmatprep.subr.mxu0 %v547
    %1547 = vmatpush1.msra.mxu0 %v546
    %1548 = vmatprep.subr.mxu0 %v544
    %1549 = vmatpush1.msra.mxu0 %v543
    %1550 = vmatprep.subr.mxu0 %v541
    %1551 = vmatpush1.msra.mxu0 %v540
    %1552 = vmatprep.subr.mxu0 %v538
    %1553 = vmatpush1.msra.mxu0 %v537
    %1554 = vmatprep.subr.mxu0 %v535
    %1555 = vmatpush1.msra.mxu0 %v534
    %1556 = vmatprep.subr.mxu0 %v532
    %1557 = vmatpush1.msra.mxu0 %v531
    %1558 = vmatprep.subr.mxu0 %v529
    %1559 = vmatpush1.msra.mxu0 %v528
    %1560 = vmatprep.subr.mxu0 %v526
    %1561 = vmatpush1.msra.mxu0 %v525
    %1562 = vmatprep.subr.mxu0 %v523
    %1563 = vmatpush1.msra.mxu0 %v522
    %1564 = vmatprep.subr.mxu0 %v520
    %1565 = vmatpush1.msra.mxu0 %v519
    %1566 = vmatprep.subr.mxu0 0.0
    %1567 = vmatpush2.msra.mxu0 0.0
    %1568 = vmatprep.subr.mxu0 0.0
    %1569 = vmatpush2.msra.mxu0 0.0
    %1570 = vmatprep.subr.mxu0 0.0
    %1571 = vmatpush2.msra.mxu0 0.0
    %1572 = vmatprep.subr.mxu0 0.0
    %1573 = vmatpush2.msra.mxu0 0.0
    %1574 = vmatprep.subr.mxu0 0.0
    %1575 = vmatpush2.msra.mxu0 0.0
    %1576 = vmatprep.subr.mxu0 0.0
    %1577 = vmatpush2.msra.mxu0 0.0
    %1578 = vmatprep.subr.mxu0 0.0
    %1579 = vmatpush2.msra.mxu0 0.0
    %1580 = vmatprep.subr.mxu0 0.0
    %1581 = vmatpush2.msra.mxu0 0.0
    %1582 = vmatprep.subr.mxu0 0.0
    %1583 = vmatpush2.msra.mxu0 0.0
    %1584 = vmatprep.subr.mxu0 0.0
    %1585 = vmatpush2.msra.mxu0 0.0
    %1586 = vmatprep.subr.mxu0 0.0
    %1587 = vmatpush2.msra.mxu0 0.0
    %1588 = vmatprep.subr.mxu0 0.0
    %1589 = vmatpush2.msra.mxu0 0.0
    %1590 = vmatprep.subr.mxu0 0.0
    %1591 = vmatpush2.msra.mxu0 0.0
    %1592 = vmatprep.subr.mxu0 0.0
    %1593 = vmatpush2.msra.mxu0 0.0
    %1594 = vmatprep.subr.mxu0 0.0
    %1595 = vmatpush2.msra.mxu0 0.0
    %1596 = vmatprep.subr.mxu0 0.0
    %1597 = vmatpush2.msra.mxu0 0.0
    %1598 = vmatprep.mubr.f32.mxu0 0.0
    %1599 = vmatmul.mubr.f32.gmra.mxu0 %v1532
    %v1600 = vpop.f32.mrf.mxu0
    %v1601 = vadd.f32 0.0, %v1600
    %v1602 = vpop.f32.mrf.mxu0
    %v1603 = vadd.f32 0.0, %v1602
    %1604 = vdwg.mxu0
    %1605 = vmatprep.subr.mxu0 0.0
    %1606 = vmatpush1.msra.mxu0 %v566
    %1607 = vmatprep.subr.mxu0 0.0
    %1608 = vmatpush1.msra.mxu0 %v563
    %1609 = vmatprep.subr.mxu0 0.0
    %1610 = vmatpush1.msra.mxu0 %v560
    %1611 = vmatprep.subr.mxu0 0.0
    %1612 = vmatpush1.msra.mxu0 %v557
    %1613 = vmatprep.subr.mxu0 0.0
    %1614 = vmatpush1.msra.mxu0 %v554
    %1615 = vmatprep.subr.mxu0 0.0
    %1616 = vmatpush1.msra.mxu0 %v551
    %1617 = vmatprep.subr.mxu0 0.0
    %1618 = vmatpush1.msra.mxu0 %v548
    %1619 = vmatprep.subr.mxu0 0.0
    %1620 = vmatpush1.msra.mxu0 %v545
    %1621 = vmatprep.subr.mxu0 0.0
    %1622 = vmatpush1.msra.mxu0 %v542
    %1623 = vmatprep.subr.mxu0 0.0
    %1624 = vmatpush1.msra.mxu0 %v539
    %1625 = vmatprep.subr.mxu0 0.0
    %1626 = vmatpush1.msra.mxu0 %v536
    %1627 = vmatprep.subr.mxu0 0.0
    %1628 = vmatpush1.msra.mxu0 %v533
    %1629 = vmatprep.subr.mxu0 0.0
    %1630 = vmatpush1.msra.mxu0 %v530
    %1631 = vmatprep.subr.mxu0 0.0
    %1632 = vmatpush1.msra.mxu0 %v527
    %1633 = vmatprep.subr.mxu0 0.0
    %1634 = vmatpush1.msra.mxu0 %v524
    %1635 = vmatprep.subr.mxu0 0.0
    %1636 = vmatpush1.msra.mxu0 %v521
    %1637 = vmatprep.subr.mxu0 0.0
    %1638 = vmatpush2.msra.mxu0 0.0
    %1639 = vmatprep.subr.mxu0 0.0
    %1640 = vmatpush2.msra.mxu0 0.0
    %1641 = vmatprep.subr.mxu0 0.0
    %1642 = vmatpush2.msra.mxu0 0.0
    %1643 = vmatprep.subr.mxu0 0.0
    %1644 = vmatpush2.msra.mxu0 0.0
    %1645 = vmatprep.subr.mxu0 0.0
    %1646 = vmatpush2.msra.mxu0 0.0
    %1647 = vmatprep.subr.mxu0 0.0
    %1648 = vmatpush2.msra.mxu0 0.0
    %1649 = vmatprep.subr.mxu0 0.0
    %1650 = vmatpush2.msra.mxu0 0.0
    %1651 = vmatprep.subr.mxu0 0.0
    %1652 = vmatpush2.msra.mxu0 0.0
    %1653 = vmatprep.subr.mxu0 0.0
    %1654 = vmatpush2.msra.mxu0 0.0
    %1655 = vmatprep.subr.mxu0 0.0
    %1656 = vmatpush2.msra.mxu0 0.0
    %1657 = vmatprep.subr.mxu0 0.0
    %1658 = vmatpush2.msra.mxu0 0.0
    %1659 = vmatprep.subr.mxu0 0.0
    %1660 = vmatpush2.msra.mxu0 0.0
    %1661 = vmatprep.subr.mxu0 0.0
    %1662 = vmatpush2.msra.mxu0 0.0
    %1663 = vmatprep.subr.mxu0 0.0
    %1664 = vmatpush2.msra.mxu0 0.0
    %1665 = vmatprep.subr.mxu0 0.0
    %1666 = vmatpush2.msra.mxu0 0.0
    %1667 = vmatprep.subr.mxu0 0.0
    %1668 = vmatpush2.msra.mxu0 0.0
    %1669 = vmatprep.mubr.f32.mxu0 0.0
    %1670 = vmatmul.mubr.f32.gmra.mxu0 %v1532
    %v1671 = vpop.f32.mrf.mxu0
    %v1672 = vadd.f32 0.0, %v1671
    %v1673 = vpop.f32.mrf.mxu0
    %1674 = vdwg.mxu0
    %v1675 = vadd.f32 %v404, %v1601
    %v1676 = vmul.f32 %v1675, 0.5
    %v1677 = vtanh.pop %v1676
    %v1678 = vadd.f32 %v1677, 1.0
    %v1679 = vmul.f32 %v1678, 0.5
    %v1680 = vadd.f32 %v406, %v1603
    %v1681 = vmul.f32 %v1680, 0.5
    %v1682 = vtanh.pop %v1681
    %v1683 = vadd.f32 %v1682, 1.0
    %v1684 = vmul.f32 %v1683, 0.5
    %v1685 = vadd.f32 %v1672, %v572
    %v1686 = vmul.f32 %v1679, %v1685
    %v1687 = vadd.f32 %v511, %v1686
    %v1688 = vtanh.pop %v1687
    %v1689 = vsub.f32 1.0, %v1684
    %v1690 = vmul.f32 %v1689, %v1688
    %v1691 = vmul.f32 %v1684, %v1532
    %v1692 = vadd.f32 %v1690, %v1691
    %1693 = vst [vmem:[#allocation2 + $0x30] sm:$0xff] %v1692
    %1694 = vmatprep.subr.mxu0 %v565
    %1695 = vmatpush1.msra.mxu0 %v564
    %1696 = vmatprep.subr.mxu0 %v562
    %1697 = vmatpush1.msra.mxu0 %v561
    %1698 = vmatprep.subr.mxu0 %v559
    %1699 = vmatpush1.msra.mxu0 %v558
    %1700 = vmatprep.subr.mxu0 %v556
    %1701 = vmatpush1.msra.mxu0 %v555
    %1702 = vmatprep.subr.mxu0 %v553
    %1703 = vmatpush1.msra.mxu0 %v552
    %1704 = vmatprep.subr.mxu0 %v550
    %1705 = vmatpush1.msra.mxu0 %v549
    %1706 = vmatprep.subr.mxu0 %v547
    %1707 = vmatpush1.msra.mxu0 %v546
    %1708 = vmatprep.subr.mxu0 %v544
    %1709 = vmatpush1.msra.mxu0 %v543
    %1710 = vmatprep.subr.mxu0 %v541
    %1711 = vmatpush1.msra.mxu0 %v540
    %1712 = vmatprep.subr.mxu0 %v538
    %1713 = vmatpush1.msra.mxu0 %v537
    %1714 = vmatprep.subr.mxu0 %v535
    %1715 = vmatpush1.msra.mxu0 %v534
    %1716 = vmatprep.subr.mxu0 %v532
    %1717 = vmatpush1.msra.mxu0 %v531
    %1718 = vmatprep.subr.mxu0 %v529
    %1719 = vmatpush1.msra.mxu0 %v528
    %1720 = vmatprep.subr.mxu0 %v526
    %1721 = vmatpush1.msra.mxu0 %v525
    %1722 = vmatprep.subr.mxu0 %v523
    %1723 = vmatpush1.msra.mxu0 %v522
    %1724 = vmatprep.subr.mxu0 %v520
    %1725 = vmatpush1.msra.mxu0 %v519
    %1726 = vmatprep.subr.mxu0 0.0
    %1727 = vmatpush2.msra.mxu0 0.0
    %1728 = vmatprep.subr.mxu0 0.0
    %1729 = vmatpush2.msra.mxu0 0.0
    %1730 = vmatprep.subr.mxu0 0.0
    %1731 = vmatpush2.msra.mxu0 0.0
    %1732 = vmatprep.subr.mxu0 0.0
    %1733 = vmatpush2.msra.mxu0 0.0
    %1734 = vmatprep.subr.mxu0 0.0
    %1735 = vmatpush2.msra.mxu0 0.0
    %1736 = vmatprep.subr.mxu0 0.0
    %1737 = vmatpush2.msra.mxu0 0.0
    %1738 = vmatprep.subr.mxu0 0.0
    %1739 = vmatpush2.msra.mxu0 0.0
    %1740 = vmatprep.subr.mxu0 0.0
    %1741 = vmatpush2.msra.mxu0 0.0
    %1742 = vmatprep.subr.mxu0 0.0
    %1743 = vmatpush2.msra.mxu0 0.0
    %1744 = vmatprep.subr.mxu0 0.0
    %1745 = vmatpush2.msra.mxu0 0.0
    %1746 = vmatprep.subr.mxu0 0.0
    %1747 = vmatpush2.msra.mxu0 0.0
    %1748 = vmatprep.subr.mxu0 0.0
    %1749 = vmatpush2.msra.mxu0 0.0
    %1750 = vmatprep.subr.mxu0 0.0
    %1751 = vmatpush2.msra.mxu0 0.0
    %1752 = vmatprep.subr.mxu0 0.0
    %1753 = vmatpush2.msra.mxu0 0.0
    %1754 = vmatprep.subr.mxu0 0.0
    %1755 = vmatpush2.msra.mxu0 0.0
    %1756 = vmatprep.subr.mxu0 0.0
    %1757 = vmatpush2.msra.mxu0 0.0
    %1758 = vmatprep.mubr.f32.mxu0 0.0
    %1759 = vmatmul.mubr.f32.gmra.mxu0 %v1692
    %v1760 = vpop.f32.mrf.mxu0
    %v1761 = vadd.f32 0.0, %v1760
    %v1762 = vpop.f32.mrf.mxu0
    %v1763 = vadd.f32 0.0, %v1762
    %1764 = vdwg.mxu0
    %1765 = vmatprep.subr.mxu0 0.0
    %1766 = vmatpush1.msra.mxu0 %v566
    %1767 = vmatprep.subr.mxu0 0.0
    %1768 = vmatpush1.msra.mxu0 %v563
    %1769 = vmatprep.subr.mxu0 0.0
    %1770 = vmatpush1.msra.mxu0 %v560
    %1771 = vmatprep.subr.mxu0 0.0
    %1772 = vmatpush1.msra.mxu0 %v557
    %1773 = vmatprep.subr.mxu0 0.0
    %1774 = vmatpush1.msra.mxu0 %v554
    %1775 = vmatprep.subr.mxu0 0.0
    %1776 = vmatpush1.msra.mxu0 %v551
    %1777 = vmatprep.subr.mxu0 0.0
    %1778 = vmatpush1.msra.mxu0 %v548
    %1779 = vmatprep.subr.mxu0 0.0
    %1780 = vmatpush1.msra.mxu0 %v545
    %1781 = vmatprep.subr.mxu0 0.0
    %1782 = vmatpush1.msra.mxu0 %v542
    %1783 = vmatprep.subr.mxu0 0.0
    %1784 = vmatpush1.msra.mxu0 %v539
    %1785 = vmatprep.subr.mxu0 0.0
    %1786 = vmatpush1.msra.mxu0 %v536
    %1787 = vmatprep.subr.mxu0 0.0
    %1788 = vmatpush1.msra.mxu0 %v533
    %1789 = vmatprep.subr.mxu0 0.0
    %1790 = vmatpush1.msra.mxu0 %v530
    %1791 = vmatprep.subr.mxu0 0.0
    %1792 = vmatpush1.msra.mxu0 %v527
    %1793 = vmatprep.subr.mxu0 0.0
    %1794 = vmatpush1.msra.mxu0 %v524
    %1795 = vmatprep.subr.mxu0 0.0
    %1796 = vmatpush1.msra.mxu0 %v521
    %1797 = vmatprep.subr.mxu0 0.0
    %1798 = vmatpush2.msra.mxu0 0.0
    %1799 = vmatprep.subr.mxu0 0.0
    %1800 = vmatpush2.msra.mxu0 0.0
    %1801 = vmatprep.subr.mxu0 0.0
    %1802 = vmatpush2.msra.mxu0 0.0
    %1803 = vmatprep.subr.mxu0 0.0
    %1804 = vmatpush2.msra.mxu0 0.0
    %1805 = vmatprep.subr.mxu0 0.0
    %1806 = vmatpush2.msra.mxu0 0.0
    %1807 = vmatprep.subr.mxu0 0.0
    %1808 = vmatpush2.msra.mxu0 0.0
    %1809 = vmatprep.subr.mxu0 0.0
    %1810 = vmatpush2.msra.mxu0 0.0
    %1811 = vmatprep.subr.mxu0 0.0
    %1812 = vmatpush2.msra.mxu0 0.0
    %1813 = vmatprep.subr.mxu0 0.0
    %1814 = vmatpush2.msra.mxu0 0.0
    %1815 = vmatprep.subr.mxu0 0.0
    %1816 = vmatpush2.msra.mxu0 0.0
    %1817 = vmatprep.subr.mxu0 0.0
    %1818 = vmatpush2.msra.mxu0 0.0
    %1819 = vmatprep.subr.mxu0 0.0
    %1820 = vmatpush2.msra.mxu0 0.0
    %1821 = vmatprep.subr.mxu0 0.0
    %1822 = vmatpush2.msra.mxu0 0.0
    %1823 = vmatprep.subr.mxu0 0.0
    %1824 = vmatpush2.msra.mxu0 0.0
    %1825 = vmatprep.subr.mxu0 0.0
    %1826 = vmatpush2.msra.mxu0 0.0
    %1827 = vmatprep.subr.mxu0 0.0
    %1828 = vmatpush2.msra.mxu0 0.0
    %1829 = vmatprep.mubr.f32.mxu0 0.0
    %1830 = vmatmul.mubr.f32.gmra.mxu0 %v1692
    %v1831 = vpop.f32.mrf.mxu0
    %v1832 = vadd.f32 0.0, %v1831
    %v1833 = vpop.f32.mrf.mxu0
    %1834 = vdwg.mxu0
    %v1835 = vadd.f32 %v410, %v1761
    %v1836 = vmul.f32 %v1835, 0.5
    %v1837 = vtanh.pop %v1836
    %v1838 = vadd.f32 %v1837, 1.0
    %v1839 = vmul.f32 %v1838, 0.5
    %v1840 = vadd.f32 %v412, %v1763
    %v1841 = vmul.f32 %v1840, 0.5
    %v1842 = vtanh.pop %v1841
    %v1843 = vadd.f32 %v1842, 1.0
    %v1844 = vmul.f32 %v1843, 0.5
    %v1845 = vadd.f32 %v1832, %v572
    %v1846 = vmul.f32 %v1839, %v1845
    %v1847 = vadd.f32 %v516, %v1846
    %v1848 = vtanh.pop %v1847
    %v1849 = vsub.f32 1.0, %v1844
    %v1850 = vmul.f32 %v1849, %v1848
    %v1851 = vmul.f32 %v1844, %v1692
    %v1852 = vadd.f32 %v1850, %v1851
    %1853 = vst [vmem:[#allocation2 + $0x38] sm:$0xff] %v1852
    %1854 = vst [vmem:[#allocation12] sm:$0xff] %v1852
    %v1855 = vld [vmem:[#allocation2] sm:$0xff]
    %v1856 = vld [vmem:[#allocation2 + $0x8] sm:$0xff]
    %v1857 = vld [vmem:[#allocation2 + $0x10] sm:$0xff]
    %v1858 = vld [vmem:[#allocation2 + $0x18] sm:$0xff]
    %v1859 = vld [vmem:[#allocation2 + $0x20] sm:$0xff]
    %v1860 = vld [vmem:[#allocation2 + $0x28] sm:$0xff]
    %v1861 = vld [vmem:[#allocation2 + $0x30] sm:$0xff]
    %v1862 = vld [vmem:[#allocation2 + $0x38] sm:$0xff]
    %v1863 = vld [vmem:[#allocation9] sm:$0xff]
    %v1864 = vld [vmem:[#allocation9 + $0x8] sm:$0xff]
    %v1865 = vld [vmem:[#allocation9 + $0x10] sm:$0xff]
    %v1866 = vld [vmem:[#allocation9 + $0x18] sm:$0xff]
    %v1867 = vld [vmem:[#allocation9 + $0x20] sm:$0xff]
    %v1868 = vld [vmem:[#allocation9 + $0x28] sm:$0xff]
    %v1869 = vld [vmem:[#allocation9 + $0x30] sm:$0xff]
    %v1870 = vld [vmem:[#allocation9 + $0x38] sm:$0xff]
    %v1871 = vld [vmem:[#allocation9 + $0x40] sm:$0xff]
    %v1872 = vld [vmem:[#allocation9 + $0x48] sm:$0xff]
    %v1873 = vld [vmem:[#allocation9 + $0x50] sm:$0xff]
    %v1874 = vld [vmem:[#allocation9 + $0x58] sm:$0xff]
    %v1875 = vld [vmem:[#allocation9 + $0x60] sm:$0xff]
    %v1876 = vld [vmem:[#allocation9 + $0x68] sm:$0xff]
    %v1877 = vld [vmem:[#allocation9 + $0x70] sm:$0xff]
    %v1878 = vld [vmem:[#allocation9 + $0x78] sm:$0xff]
    %v1879 = vld [vmem:[%s9] sm:$0x1]
    %v1881 = vlaneseq
    %v1882 = vshrl.u32 %v1881, 7
    %v1883 = vsub.s32 0, %v1882
    %v1884 = vrot.slane %v1879, %v1883
    %1886 = vmatprep.subr.mxu0 0.0
    %1887 = vmatpush1.msra.mxu0 %v1878
    %1888 = vmatprep.subr.mxu0 0.0
    %1889 = vmatpush1.msra.mxu0 %v1877
    %1890 = vmatprep.subr.mxu0 0.0
    %1891 = vmatpush1.msra.mxu0 %v1876
    %1892 = vmatprep.subr.mxu0 0.0
    %1893 = vmatpush1.msra.mxu0 %v1875
    %1894 = vmatprep.subr.mxu0 0.0
    %1895 = vmatpush1.msra.mxu0 %v1874
    %1896 = vmatprep.subr.mxu0 0.0
    %1897 = vmatpush1.msra.mxu0 %v1873
    %1898 = vmatprep.subr.mxu0 0.0
    %1899 = vmatpush1.msra.mxu0 %v1872
    %1900 = vmatprep.subr.mxu0 0.0
    %1901 = vmatpush1.msra.mxu0 %v1871
    %1902 = vmatprep.subr.mxu0 0.0
    %1903 = vmatpush1.msra.mxu0 %v1870
    %1904 = vmatprep.subr.mxu0 0.0
    %1905 = vmatpush1.msra.mxu0 %v1869
    %1906 = vmatprep.subr.mxu0 0.0
    %1907 = vmatpush1.msra.mxu0 %v1868
    %1908 = vmatprep.subr.mxu0 0.0
    %1909 = vmatpush1.msra.mxu0 %v1867
    %1910 = vmatprep.subr.mxu0 0.0
    %1911 = vmatpush1.msra.mxu0 %v1866
    %1912 = vmatprep.subr.mxu0 0.0
    %1913 = vmatpush1.msra.mxu0 %v1865
    %1914 = vmatprep.subr.mxu0 0.0
    %1915 = vmatpush1.msra.mxu0 %v1864
    %1916 = vmatprep.subr.mxu0 0.0
    %1917 = vmatpush1.msra.mxu0 %v1863
    %1918 = vmatprep.subr.mxu0 0.0
    %1919 = vmatpush2.msra.mxu0 0.0
    %1920 = vmatprep.subr.mxu0 0.0
    %1921 = vmatpush2.msra.mxu0 0.0
    %1922 = vmatprep.subr.mxu0 0.0
    %1923 = vmatpush2.msra.mxu0 0.0
    %1924 = vmatprep.subr.mxu0 0.0
    %1925 = vmatpush2.msra.mxu0 0.0
    %1926 = vmatprep.subr.mxu0 0.0
    %1927 = vmatpush2.msra.mxu0 0.0
    %1928 = vmatprep.subr.mxu0 0.0
    %1929 = vmatpush2.msra.mxu0 0.0
    %1930 = vmatprep.subr.mxu0 0.0
    %1931 = vmatpush2.msra.mxu0 0.0
    %1932 = vmatprep.subr.mxu0 0.0
    %1933 = vmatpush2.msra.mxu0 0.0
    %1934 = vmatprep.subr.mxu0 0.0
    %1935 = vmatpush2.msra.mxu0 0.0
    %1936 = vmatprep.subr.mxu0 0.0
    %1937 = vmatpush2.msra.mxu0 0.0
    %1938 = vmatprep.subr.mxu0 0.0
    %1939 = vmatpush2.msra.mxu0 0.0
    %1940 = vmatprep.subr.mxu0 0.0
    %1941 = vmatpush2.msra.mxu0 0.0
    %1942 = vmatprep.subr.mxu0 0.0
    %1943 = vmatpush2.msra.mxu0 0.0
    %1944 = vmatprep.subr.mxu0 0.0
    %1945 = vmatpush2.msra.mxu0 0.0
    %1946 = vmatprep.subr.mxu0 0.0
    %1947 = vmatpush2.msra.mxu0 0.0
    %1948 = vmatprep.subr.mxu0 0.0
    %1949 = vmatpush2.msra.mxu0 0.0
    %1950 = vmatprep.mubr.f32.mxu0 0.0
    %1951 = vmatmul.mubr.f32.gmra.mxu0 %v1855
    %v1952 = vpop.f32.mrf.mxu0
    %v1953 = vadd.f32 %v1884, %v1952
    %v1954 = vpop.f32.mrf.mxu0
    %1955 = vmatprep.mubr.f32.mxu0 0.0
    %1956 = vmatmul.mubr.f32.gmra.mxu0 %v1856
    %v1957 = vpop.f32.mrf.mxu0
    %v1958 = vadd.f32 %v1884, %v1957
    %v1959 = vpop.f32.mrf.mxu0
    %1960 = vmatprep.mubr.f32.mxu0 0.0
    %1961 = vmatmul.mubr.f32.gmra.mxu0 %v1857
    %v1962 = vpop.f32.mrf.mxu0
    %v1963 = vadd.f32 %v1884, %v1962
    %v1964 = vpop.f32.mrf.mxu0
    %1965 = vmatprep.mubr.f32.mxu0 0.0
    %1966 = vmatmul.mubr.f32.gmra.mxu0 %v1858
    %v1967 = vpop.f32.mrf.mxu0
    %v1968 = vadd.f32 %v1884, %v1967
    %v1969 = vpop.f32.mrf.mxu0
    %1970 = vmatprep.mubr.f32.mxu0 0.0
    %1971 = vmatmul.mubr.f32.gmra.mxu0 %v1859
    %v1972 = vpop.f32.mrf.mxu0
    %v1973 = vadd.f32 %v1884, %v1972
    %v1974 = vpop.f32.mrf.mxu0
    %1975 = vmatprep.mubr.f32.mxu0 0.0
    %1976 = vmatmul.mubr.f32.gmra.mxu0 %v1860
    %v1977 = vpop.f32.mrf.mxu0
    %v1978 = vadd.f32 %v1884, %v1977
    %v1979 = vpop.f32.mrf.mxu0
    %1980 = vmatprep.mubr.f32.mxu0 0.0
    %1981 = vmatmul.mubr.f32.gmra.mxu0 %v1861
    %v1982 = vpop.f32.mrf.mxu0
    %v1983 = vadd.f32 %v1884, %v1982
    %v1984 = vpop.f32.mrf.mxu0
    %1985 = vmatprep.mubr.f32.mxu0 0.0
    %1986 = vmatmul.mubr.f32.gmra.mxu0 %v1862
    %v1987 = vpop.f32.mrf.mxu0
    %v1988 = vadd.f32 %v1884, %v1987
    %v1989 = vpop.f32.mrf.mxu0
    %1990 = vdwg.mxu0
    %1991 = vst [vmem:[#allocation11] sm:$0xff] %v1953
    %1992 = vst [vmem:[#allocation11 + $0x8] sm:$0xff] %v1958
    %1993 = vst [vmem:[#allocation11 + $0x10] sm:$0xff] %v1963
    %1994 = vst [vmem:[#allocation11 + $0x18] sm:$0xff] %v1968
    %1995 = vst [vmem:[#allocation11 + $0x20] sm:$0xff] %v1973
    %1996 = vst [vmem:[#allocation11 + $0x28] sm:$0xff] %v1978
    %1997 = vst [vmem:[#allocation11 + $0x30] sm:$0xff] %v1983
    %1998 = vst [vmem:[#allocation11 + $0x38] sm:$0xff] %v1988
    // Predicated region
    $region58: #{tpu_custom_call.1} parent=1 // pred_check
      _
    $region59: #{tpu_custom_call.1} parent=1 // pred_check_branch
      %2000 = sbr.rel (0) target = $region61
    $region60: #{tpu_custom_call.1} parent=1 // pred_region
      %s2002 = ssub.s32 1024, 1024
      %2003 = vsyncadd [#allocation5], %s2002
      %s2004 = sshll.u32 [#allocation11], 4
      %s2005 = int_to_ptr.vmem [resolvable:$true] %s2004
      %2010 = dma.vmem_to_hbm [thread:$0]  %s2005, 1024, %s10, [#allocation5], 128, 128, 8
    $region61: #{tpu_custom_call.1} parent=1 // pred_fallthru
      _
    // Predicated region
    $region62: #{tpu_custom_call.1} parent=1 // pred_check
      _
    $region63: #{tpu_custom_call.1} parent=1 // pred_check_branch
      %2012 = sbr.rel (0) target = $region65
    $region64: #{tpu_custom_call.1} parent=1 // pred_region
      %s2014 = ssub.s32 128, 128
      %2015 = vsyncadd [#allocation13], %s2014
      %s2017 = sshll.u32 [#allocation12], 4
      %s2018 = int_to_ptr.vmem [resolvable:$true] %s2017
      %2020 = dma.vmem_to_hbm [thread:$0]  %s2018, 128, %s11, [#allocation13]
    $region65: #{tpu_custom_call.1} parent=1 // pred_fallthru
      _
    // Predicated region
    $region66: #{tpu_custom_call.1} parent=1 // pred_check
      _
    $region67: #{tpu_custom_call.1} parent=1 // pred_check_branch
      %2022 = sbr.rel (0) target = $region69
    $region68: #{tpu_custom_call.1} parent=1 // pred_region
      %2023 = dma.done [#allocation5], 1024
    $region69: #{tpu_custom_call.1} parent=1 // pred_fallthru
      _
    // Predicated region
    $region70: #{tpu_custom_call.1} parent=1 // pred_check
      _
    $region71: #{tpu_custom_call.1} parent=1 // pred_check_branch
      %2025 = sbr.rel (0) target = $region73
    $region72: #{tpu_custom_call.1} parent=1 // pred_region
      %2026 = dma.done [#allocation13], 128
    $region73: #{tpu_custom_call.1} parent=1 // pred_fallthru
      _
    %2027 = vsyncpa [#allocation4], 1
    %2028 = vsyncpa [#allocation7], 1
    %2029 = vsyncpa [#allocation10], 1
    %2030 = vsyncpa [#allocation5], 1
    %2031 = vsyncpa [#allocation13], 1

</llo_original>
